<compile_context>
chip_gen: v5e
topology: v5e:2x2
jax: 0.10.0
libtpu: 0.0.40
codegen_flags: <defaults>
</compile_context>

<pallas_src>
import functools

import jax
import jax.numpy as jnp
from jax.experimental import pallas as pl
from jax.experimental.pallas import tpu as pltpu

HIDDEN = 64          # LSTM hidden size per direction (matches the module)
LINEAR = 64          # width of self.linear output

# Packed gate-block order (each block is 2H = 128 lanes = [fwd 64 | bwd 64]).
# PyTorch gate row order is (i, f, g, o); we pack as (i, f, o, g) so the three
# sigmoid gates are contiguous and every kernel slice is 128-lane aligned.
_GATE_ORDER = (0, 1, 3, 2)   # PyTorch gate index for packed blocks 0..3


def _sigmoid(x):
    # Explicit form: exp lowers to the EUP on all TPU generations.
    return 1.0 / (1.0 + jnp.exp(-x))


def _bilstm_kernel(emb_ref,                 # (T*B, 2E)  row t*B..t*B+B-1 = [x_t | x_{T-1-t}]
                   wih_ref,                 # (2E, 8H)   packed input->gate weights (both dirs)
                   whh_ref,                 # (2H, 8H)   block-diagonal recurrent weights
                   b_ref,                   # (1, 8H)    combined b_ih + b_hh, packed layout
                   w1a_ref, w1b_ref, b1_ref,  # (2H,64), (2H,64), (1,64)  split linear
                   w2_ref, b2_ref,          # (64,128), (1,128)  lane-padded output head
                   out_ref,                 # (B, 128)   lane-dense sigmoid output (col 0 real)
                   gin_ref,                 # scratch VMEM (T*B, 8H): precomputed input gates
                   *, T, B):
    H2 = 2 * HIDDEN   # 128 lanes per gate block ([fwd | bwd])

    # ---- off the critical path: every timestep's input projection at once ----
    gin_ref[...] = (
        jnp.dot(emb_ref[...], wih_ref[...], preferred_element_type=jnp.float32)
        + b_ref[...])

    whh = whh_ref[...]                                    # (2H, 8H)

    h = jnp.zeros((B, H2), jnp.float32)                   # [h_fwd | h_bwd]
    c = jnp.zeros((B, H2), jnp.float32)
    s = jnp.zeros((B, H2), jnp.float32)                   # running sum  (avg pool)
    m = jnp.full((B, H2), -jnp.inf, jnp.float32)          # running max  (max pool)

    # ---- fully unrolled recurrence: one fused MXU push per step ----
    for t in range(T):
        gates = gin_ref[t * B:(t + 1) * B, :] + jnp.dot(
            h, whh, preferred_element_type=jnp.float32)   # (B, 8H)
        i_g = _sigmoid(gates[:, 0 * H2:1 * H2])
        f_g = _sigmoid(gates[:, 1 * H2:2 * H2])
        o_g = _sigmoid(gates[:, 2 * H2:3 * H2])
        g_g = jnp.tanh(gates[:, 3 * H2:4 * H2])
        c = f_g * c + i_g * g_g
        h = o_g * jnp.tanh(c)
        s = s + h
        m = jnp.maximum(m, h)

    # ---- pooled MLP head (w1 pre-split host-side: no lane concatenation) ----
    inv_T = jnp.float32(1.0 / T)
    hidden = (jnp.dot(s, w1a_ref[...], preferred_element_type=jnp.float32) * inv_T
              + jnp.dot(m, w1b_ref[...], preferred_element_type=jnp.float32)
              + b1_ref[...])
    hidden = jnp.maximum(hidden, 0.0)                     # ReLU
    # TODO(synk): nn.Dropout(0.1) is identity at inference; training-mode
    # stochastic masking (pltpu.prng_*) is omitted here.
    logits = jnp.dot(hidden, w2_ref[...], preferred_element_type=jnp.float32) + b2_ref[...]
    out_ref[...] = _sigmoid(logits)                       # (B, 128), column 0 is the result


def bilstm_forward(token_ids, params):
    """token_ids: (B, T) int32.  Returns (B, 1) float32 sigmoid activations."""
    B, T = token_ids.shape
    E = params["embedding"].shape[1]
    H = HIDDEN
    B_pad = max(8, ((B + 7) // 8) * 8)

    # Time-major gather directly (no (B,T,E)->(T,B,E) transpose pass).
    emb_tm = params["embedding"][token_ids.T]                       # (T, B, E)
    emb_tm = jnp.pad(emb_tm, ((0, 0), (0, B_pad - B), (0, 0)))      # (T, Bp, E)
    # Per visit step t the kernel needs x_t (fwd) and x_{T-1-t} (bwd).
    emb_cat = jnp.concatenate([emb_tm, emb_tm[::-1]], axis=-1)      # (T, Bp, 2E)
    emb_flat = emb_cat.reshape(T * B_pad, 2 * E)

    vmem = pl.BlockSpec(memory_space=pltpu.MemorySpace.VMEM)
    kernel = pl.pallas_call(
        functools.partial(_bilstm_kernel, T=T, B=B_pad),
        out_shape=jax.ShapeDtypeStruct((B_pad, 128), jnp.float32),
        in_specs=[vmem] * 9,
        out_specs=vmem,
        scratch_shapes=[pltpu.VMEM((T * B_pad, 8 * H), jnp.float32)],
    )
    out = kernel(
        emb_flat,
        params["wih_pack"], params["whh_pack"], params["b_pack"],
        params["w1_avg"], params["w1_max"], params["b1"],
        params["w2_pad"], params["b2_pad"],
    )
    return out[:B, :1]


def pack_params(embedding, fwd, bwd, w1, b1, w2, b2):
    """Pack PyTorch-layout weights into the kernel's fused/aligned layout."""
    H = HIDDEN
    (wih_f, whh_f, bias_f), (wih_b, whh_b, bias_b) = fwd, bwd
    E = wih_f.shape[1]

    wih_pack = jnp.zeros((2 * E, 8 * H), jnp.float32)
    whh_pack = jnp.zeros((2 * H, 8 * H), jnp.float32)
    b_pack = jnp.zeros((1, 8 * H), jnp.float32)
    for blk, g in enumerate(_GATE_ORDER):
        cf = slice((2 * blk) * H, (2 * blk + 1) * H)       # fwd half of block
        cb = slice((2 * blk + 1) * H, (2 * blk + 2) * H)   # bwd half of block
        src = slice(g * H, (g + 1) * H)
        wih_pack = wih_pack.at[0:E, cf].set(wih_f[src].T)
        wih_pack = wih_pack.at[E:2 * E, cb].set(wih_b[src].T)
        whh_pack = whh_pack.at[0:H, cf].set(whh_f[src].T)
        whh_pack = whh_pack.at[H:2 * H, cb].set(whh_b[src].T)
        b_pack = b_pack.at[0, cf].set(bias_f[src])
        b_pack = b_pack.at[0, cb].set(bias_b[src])

    w1_t = w1.T                                            # (4H, 64)
    w1_avg = w1_t[:2 * H]                                  # rows hit by avg pool
    w1_max = w1_t[2 * H:]                                  # rows hit by max pool
    b1_row = b1.reshape(1, LINEAR)

    w2_pad = jnp.zeros((LINEAR, 128), jnp.float32).at[:, 0:1].set(w2.T)
    b2_pad = jnp.zeros((1, 128), jnp.float32).at[0, 0].set(b2[0])

    return dict(embedding=embedding,
                wih_pack=wih_pack, whh_pack=whh_pack, b_pack=b_pack,
                w1_avg=w1_avg, w1_max=w1_max, b1=b1_row,
                w2_pad=w2_pad, b2_pad=b2_pad)


def init_params(key, vocab_size, embedding_dim):
    """Deterministic synthetic parameters in PyTorch layout, then packed."""
    H = HIDDEN
    keys = jax.random.split(key, 16)

    def unif(k, shape, fan_in):
        bound = 1.0 / jnp.sqrt(jnp.float32(fan_in))
        return jax.random.uniform(k, shape, jnp.float32, -bound, bound)

    # nn.Embedding(vocab_size, embedding_dim)
    embedding = jax.random.normal(keys[0], (vocab_size, embedding_dim), jnp.float32)

    # nn.LSTM(E, H, bidirectional=True): per direction, PyTorch layout
    #   weight_ih (4H, E), weight_hh (4H, H), bias_ih (4H,), bias_hh (4H,)
    def lstm_dir(k0, k1, k2, k3):
        w_ih = unif(k0, (4 * H, embedding_dim), H)
        w_hh = unif(k1, (4 * H, H), H)
        b = unif(k2, (4 * H,), H) + unif(k3, (4 * H,), H)   # b_ih + b_hh combined
        return w_ih, w_hh, b

    fwd = lstm_dir(keys[1], keys[2], keys[3], keys[4])
    bwd = lstm_dir(keys[5], keys[6], keys[7], keys[8])

    # nn.Linear(4H, 64) and nn.Linear(64, 1), PyTorch layout (out, in)
    w1 = unif(keys[9], (LINEAR, 4 * H), 4 * H)
    b1 = unif(keys[10], (LINEAR,), 4 * H)
    w2 = unif(keys[11], (1, LINEAR), LINEAR)
    b2 = unif(keys[12], (1,), LINEAR)

    return pack_params(embedding, fwd, bwd, w1, b1, w2, b2)


if __name__ == "__main__":
    vocab_size = 50
    embedding_dim = 32
    batch = 2
    seq_len = 8

    key = jax.random.PRNGKey(0)
    k_params, k_tokens = jax.random.split(key)

    params = init_params(k_params, vocab_size, embedding_dim)
    token_ids = jax.random.randint(k_tokens, (batch, seq_len), 0, vocab_size, jnp.int32)

    out = jax.jit(bilstm_forward)(token_ids, params)
    out = jax.block_until_ready(out)

    assert out.shape == (batch, 1), out.shape
    assert bool(jnp.all(jnp.isfinite(out)))
    assert bool(jnp.all((out >= 0.0) & (out <= 1.0)))
    print("KERNEL_OK")
</pallas_src>

<mosaic_0001>
module attributes {stable_mosaic.version = 11 : i64} {
  func.func @_bilstm_kernel(%arg0: memref<64x64xf32, #tpu.memory_space<vmem>>, %arg1: memref<64x512xf32, #tpu.memory_space<vmem>>, %arg2: memref<128x512xf32, #tpu.memory_space<vmem>>, %arg3: memref<1x512xf32, #tpu.memory_space<vmem>>, %arg4: memref<128x64xf32, #tpu.memory_space<vmem>>, %arg5: memref<128x64xf32, #tpu.memory_space<vmem>>, %arg6: memref<1x64xf32, #tpu.memory_space<vmem>>, %arg7: memref<64x128xf32, #tpu.memory_space<vmem>>, %arg8: memref<1x128xf32, #tpu.memory_space<vmem>>, %arg9: memref<8x128xf32, #tpu.memory_space<vmem>>, %arg10: memref<64x512xf32, #tpu.memory_space<vmem>>) attributes {dimension_semantics = [], scalar_prefetch = 0 : i64, scratch_operands = 1 : i64, tpu.core_type = #tpu.core_type<tc>} {
    %c0 = arith.constant 0 : index
    %c0_0 = arith.constant 0 : index
    %0 = vector.load %arg0[%c0, %c0_0] : memref<64x64xf32, #tpu.memory_space<vmem>>, vector<64x64xf32>
    %c0_1 = arith.constant 0 : index
    %c0_2 = arith.constant 0 : index
    %1 = vector.load %arg1[%c0_1, %c0_2] : memref<64x512xf32, #tpu.memory_space<vmem>>, vector<64x512xf32>
    %cst = arith.constant dense<0.000000e+00> : vector<64x512xf32>
    %2 = tpu.matmul %0, %1, %cst {dimension_numbers = #tpu.dot_dimension_numbers<[1], [0], [0], [1], [0, 0, 1, 1], [], []>} : vector<64x64xf32>, vector<64x512xf32>, vector<64x512xf32> -> vector<64x512xf32>
    %c0_3 = arith.constant 0 : index
    %c0_4 = arith.constant 0 : index
    %3 = vector.load %arg3[%c0_3, %c0_4] : memref<1x512xf32, #tpu.memory_space<vmem>>, vector<1x512xf32>
    %4 = vector.broadcast %3 : vector<1x512xf32> to vector<64x512xf32>
    %5 = arith.addf %2, %4 : vector<64x512xf32>
    %c0_5 = arith.constant 0 : index
    %c0_6 = arith.constant 0 : index
    %6 = vector.load %arg10[%c0_5, %c0_6] : memref<64x512xf32, #tpu.memory_space<vmem>>, vector<64x512xf32>
    tpu.vector_store %arg10[%c0_5, %c0_6], %5 {strides = array<i32>} : memref<64x512xf32, #tpu.memory_space<vmem>>, vector<64x512xf32>,
    %c0_7 = arith.constant 0 : index
    %c0_8 = arith.constant 0 : index
    %7 = vector.load %arg2[%c0_7, %c0_8] : memref<128x512xf32, #tpu.memory_space<vmem>>, vector<128x512xf32>
    %cst_9 = arith.constant 0.000000e+00 : f32
    %8 = vector.broadcast %cst_9 : f32 to vector<8x128xf32>
    %cst_10 = arith.constant 0.000000e+00 : f32
    %9 = vector.broadcast %cst_10 : f32 to vector<8x128xf32>
    %cst_11 = arith.constant 0.000000e+00 : f32
    %10 = vector.broadcast %cst_11 : f32 to vector<8x128xf32>
    %cst_12 = arith.constant 0xFF800000 : f32
    %11 = vector.broadcast %cst_12 : f32 to vector<8x128xf32>
    %c0_13 = arith.constant 0 : index
    %c0_14 = arith.constant 0 : index
    %12 = vector.load %arg10[%c0_13, %c0_14] : memref<64x512xf32, #tpu.memory_space<vmem>>, vector<8x512xf32>
    %cst_15 = arith.constant dense<0.000000e+00> : vector<8x512xf32>
    %13 = tpu.matmul %8, %7, %cst_15 {dimension_numbers = #tpu.dot_dimension_numbers<[1], [0], [0], [1], [0, 0, 1, 1], [], []>} : vector<8x128xf32>, vector<128x512xf32>, vector<8x512xf32> -> vector<8x512xf32>
    %14 = arith.addf %12, %13 : vector<8x512xf32>
    %15 = vector.extract_strided_slice %14 {offsets = [0, 0], sizes = [8, 128], strides = [1, 1]} : vector<8x512xf32> to vector<8x128xf32>
    %cst_16 = arith.constant 0.000000e+00 : f32
    %16 = vector.broadcast %cst_16 : f32 to vector<8x128xf32>
    %17 = arith.subf %16, %15 : vector<8x128xf32>
    %18 = math.exp %17 : vector<8x128xf32>
    %cst_17 = arith.constant 1.000000e+00 : f32
    %19 = vector.broadcast %cst_17 : f32 to vector<8x128xf32>
    %20 = arith.addf %19, %18 : vector<8x128xf32>
    %cst_18 = arith.constant 1.000000e+00 : f32
    %21 = vector.broadcast %cst_18 : f32 to vector<8x128xf32>
    %22 = arith.divf %21, %20 : vector<8x128xf32>
    %23 = vector.extract_strided_slice %14 {offsets = [0, 128], sizes = [8, 128], strides = [1, 1]} : vector<8x512xf32> to vector<8x128xf32>
    %cst_19 = arith.constant 0.000000e+00 : f32
    %24 = vector.broadcast %cst_19 : f32 to vector<8x128xf32>
    %25 = arith.subf %24, %23 : vector<8x128xf32>
    %26 = math.exp %25 : vector<8x128xf32>
    %cst_20 = arith.constant 1.000000e+00 : f32
    %27 = vector.broadcast %cst_20 : f32 to vector<8x128xf32>
    %28 = arith.addf %27, %26 : vector<8x128xf32>
    %cst_21 = arith.constant 1.000000e+00 : f32
    %29 = vector.broadcast %cst_21 : f32 to vector<8x128xf32>
    %30 = arith.divf %29, %28 : vector<8x128xf32>
    %31 = vector.extract_strided_slice %14 {offsets = [0, 256], sizes = [8, 128], strides = [1, 1]} : vector<8x512xf32> to vector<8x128xf32>
    %cst_22 = arith.constant 0.000000e+00 : f32
    %32 = vector.broadcast %cst_22 : f32 to vector<8x128xf32>
    %33 = arith.subf %32, %31 : vector<8x128xf32>
    %34 = math.exp %33 : vector<8x128xf32>
    %cst_23 = arith.constant 1.000000e+00 : f32
    %35 = vector.broadcast %cst_23 : f32 to vector<8x128xf32>
    %36 = arith.addf %35, %34 : vector<8x128xf32>
    %cst_24 = arith.constant 1.000000e+00 : f32
    %37 = vector.broadcast %cst_24 : f32 to vector<8x128xf32>
    %38 = arith.divf %37, %36 : vector<8x128xf32>
    %39 = vector.extract_strided_slice %14 {offsets = [0, 384], sizes = [8, 128], strides = [1, 1]} : vector<8x512xf32> to vector<8x128xf32>
    %40 = math.tanh %39 : vector<8x128xf32>
    %41 = arith.mulf %30, %9 : vector<8x128xf32>
    %42 = arith.mulf %22, %40 : vector<8x128xf32>
    %43 = arith.addf %41, %42 : vector<8x128xf32>
    %44 = math.tanh %43 : vector<8x128xf32>
    %45 = arith.mulf %38, %44 : vector<8x128xf32>
    %46 = arith.addf %10, %45 : vector<8x128xf32>
    %47 = arith.maximumf %11, %45 : vector<8x128xf32>
    %c8 = arith.constant 8 : index
    %c0_25 = arith.constant 0 : index
    %48 = vector.load %arg10[%c8, %c0_25] : memref<64x512xf32, #tpu.memory_space<vmem>>, vector<8x512xf32>
    %cst_26 = arith.constant dense<0.000000e+00> : vector<8x512xf32>
    %49 = tpu.matmul %45, %7, %cst_26 {dimension_numbers = #tpu.dot_dimension_numbers<[1], [0], [0], [1], [0, 0, 1, 1], [], []>} : vector<8x128xf32>, vector<128x512xf32>, vector<8x512xf32> -> vector<8x512xf32>
    %50 = arith.addf %48, %49 : vector<8x512xf32>
    %51 = vector.extract_strided_slice %50 {offsets = [0, 0], sizes = [8, 128], strides = [1, 1]} : vector<8x512xf32> to vector<8x128xf32>
    %cst_27 = arith.constant 0.000000e+00 : f32
    %52 = vector.broadcast %cst_27 : f32 to vector<8x128xf32>
    %53 = arith.subf %52, %51 : vector<8x128xf32>
    %54 = math.exp %53 : vector<8x128xf32>
    %cst_28 = arith.constant 1.000000e+00 : f32
    %55 = vector.broadcast %cst_28 : f32 to vector<8x128xf32>
    %56 = arith.addf %55, %54 : vector<8x128xf32>
    %cst_29 = arith.constant 1.000000e+00 : f32
    %57 = vector.broadcast %cst_29 : f32 to vector<8x128xf32>
    %58 = arith.divf %57, %56 : vector<8x128xf32>
    %59 = vector.extract_strided_slice %50 {offsets = [0, 128], sizes = [8, 128], strides = [1, 1]} : vector<8x512xf32> to vector<8x128xf32>
    %cst_30 = arith.constant 0.000000e+00 : f32
    %60 = vector.broadcast %cst_30 : f32 to vector<8x128xf32>
    %61 = arith.subf %60, %59 : vector<8x128xf32>
    %62 = math.exp %61 : vector<8x128xf32>
    %cst_31 = arith.constant 1.000000e+00 : f32
    %63 = vector.broadcast %cst_31 : f32 to vector<8x128xf32>
    %64 = arith.addf %63, %62 : vector<8x128xf32>
    %cst_32 = arith.constant 1.000000e+00 : f32
    %65 = vector.broadcast %cst_32 : f32 to vector<8x128xf32>
    %66 = arith.divf %65, %64 : vector<8x128xf32>
    %67 = vector.extract_strided_slice %50 {offsets = [0, 256], sizes = [8, 128], strides = [1, 1]} : vector<8x512xf32> to vector<8x128xf32>
    %cst_33 = arith.constant 0.000000e+00 : f32
    %68 = vector.broadcast %cst_33 : f32 to vector<8x128xf32>
    %69 = arith.subf %68, %67 : vector<8x128xf32>
    %70 = math.exp %69 : vector<8x128xf32>
    %cst_34 = arith.constant 1.000000e+00 : f32
    %71 = vector.broadcast %cst_34 : f32 to vector<8x128xf32>
    %72 = arith.addf %71, %70 : vector<8x128xf32>
    %cst_35 = arith.constant 1.000000e+00 : f32
    %73 = vector.broadcast %cst_35 : f32 to vector<8x128xf32>
    %74 = arith.divf %73, %72 : vector<8x128xf32>
    %75 = vector.extract_strided_slice %50 {offsets = [0, 384], sizes = [8, 128], strides = [1, 1]} : vector<8x512xf32> to vector<8x128xf32>
    %76 = math.tanh %75 : vector<8x128xf32>
    %77 = arith.mulf %66, %43 : vector<8x128xf32>
    %78 = arith.mulf %58, %76 : vector<8x128xf32>
    %79 = arith.addf %77, %78 : vector<8x128xf32>
    %80 = math.tanh %79 : vector<8x128xf32>
    %81 = arith.mulf %74, %80 : vector<8x128xf32>
    %82 = arith.addf %46, %81 : vector<8x128xf32>
    %83 = arith.maximumf %47, %81 : vector<8x128xf32>
    %c16 = arith.constant 16 : index
    %c0_36 = arith.constant 0 : index
    %84 = vector.load %arg10[%c16, %c0_36] : memref<64x512xf32, #tpu.memory_space<vmem>>, vector<8x512xf32>
    %cst_37 = arith.constant dense<0.000000e+00> : vector<8x512xf32>
    %85 = tpu.matmul %81, %7, %cst_37 {dimension_numbers = #tpu.dot_dimension_numbers<[1], [0], [0], [1], [0, 0, 1, 1], [], []>} : vector<8x128xf32>, vector<128x512xf32>, vector<8x512xf32> -> vector<8x512xf32>
    %86 = arith.addf %84, %85 : vector<8x512xf32>
    %87 = vector.extract_strided_slice %86 {offsets = [0, 0], sizes = [8, 128], strides = [1, 1]} : vector<8x512xf32> to vector<8x128xf32>
    %cst_38 = arith.constant 0.000000e+00 : f32
    %88 = vector.broadcast %cst_38 : f32 to vector<8x128xf32>
    %89 = arith.subf %88, %87 : vector<8x128xf32>
    %90 = math.exp %89 : vector<8x128xf32>
    %cst_39 = arith.constant 1.000000e+00 : f32
    %91 = vector.broadcast %cst_39 : f32 to vector<8x128xf32>
    %92 = arith.addf %91, %90 : vector<8x128xf32>
    %cst_40 = arith.constant 1.000000e+00 : f32
    %93 = vector.broadcast %cst_40 : f32 to vector<8x128xf32>
    %94 = arith.divf %93, %92 : vector<8x128xf32>
    %95 = vector.extract_strided_slice %86 {offsets = [0, 128], sizes = [8, 128], strides = [1, 1]} : vector<8x512xf32> to vector<8x128xf32>
    %cst_41 = arith.constant 0.000000e+00 : f32
    %96 = vector.broadcast %cst_41 : f32 to vector<8x128xf32>
    %97 = arith.subf %96, %95 : vector<8x128xf32>
    %98 = math.exp %97 : vector<8x128xf32>
    %cst_42 = arith.constant 1.000000e+00 : f32
    %99 = vector.broadcast %cst_42 : f32 to vector<8x128xf32>
    %100 = arith.addf %99, %98 : vector<8x128xf32>
    %cst_43 = arith.constant 1.000000e+00 : f32
    %101 = vector.broadcast %cst_43 : f32 to vector<8x128xf32>
    %102 = arith.divf %101, %100 : vector<8x128xf32>
    %103 = vector.extract_strided_slice %86 {offsets = [0, 256], sizes = [8, 128], strides = [1, 1]} : vector<8x512xf32> to vector<8x128xf32>
    %cst_44 = arith.constant 0.000000e+00 : f32
    %104 = vector.broadcast %cst_44 : f32 to vector<8x128xf32>
    %105 = arith.subf %104, %103 : vector<8x128xf32>
    %106 = math.exp %105 : vector<8x128xf32>
    %cst_45 = arith.constant 1.000000e+00 : f32
    %107 = vector.broadcast %cst_45 : f32 to vector<8x128xf32>
    %108 = arith.addf %107, %106 : vector<8x128xf32>
    %cst_46 = arith.constant 1.000000e+00 : f32
    %109 = vector.broadcast %cst_46 : f32 to vector<8x128xf32>
    %110 = arith.divf %109, %108 : vector<8x128xf32>
    %111 = vector.extract_strided_slice %86 {offsets = [0, 384], sizes = [8, 128], strides = [1, 1]} : vector<8x512xf32> to vector<8x128xf32>
    %112 = math.tanh %111 : vector<8x128xf32>
    %113 = arith.mulf %102, %79 : vector<8x128xf32>
    %114 = arith.mulf %94, %112 : vector<8x128xf32>
    %115 = arith.addf %113, %114 : vector<8x128xf32>
    %116 = math.tanh %115 : vector<8x128xf32>
    %117 = arith.mulf %110, %116 : vector<8x128xf32>
    %118 = arith.addf %82, %117 : vector<8x128xf32>
    %119 = arith.maximumf %83, %117 : vector<8x128xf32>
    %c24 = arith.constant 24 : index
    %c0_47 = arith.constant 0 : index
    %120 = vector.load %arg10[%c24, %c0_47] : memref<64x512xf32, #tpu.memory_space<vmem>>, vector<8x512xf32>
    %cst_48 = arith.constant dense<0.000000e+00> : vector<8x512xf32>
    %121 = tpu.matmul %117, %7, %cst_48 {dimension_numbers = #tpu.dot_dimension_numbers<[1], [0], [0], [1], [0, 0, 1, 1], [], []>} : vector<8x128xf32>, vector<128x512xf32>, vector<8x512xf32> -> vector<8x512xf32>
    %122 = arith.addf %120, %121 : vector<8x512xf32>
    %123 = vector.extract_strided_slice %122 {offsets = [0, 0], sizes = [8, 128], strides = [1, 1]} : vector<8x512xf32> to vector<8x128xf32>
    %cst_49 = arith.constant 0.000000e+00 : f32
    %124 = vector.broadcast %cst_49 : f32 to vector<8x128xf32>
    %125 = arith.subf %124, %123 : vector<8x128xf32>
    %126 = math.exp %125 : vector<8x128xf32>
    %cst_50 = arith.constant 1.000000e+00 : f32
    %127 = vector.broadcast %cst_50 : f32 to vector<8x128xf32>
    %128 = arith.addf %127, %126 : vector<8x128xf32>
    %cst_51 = arith.constant 1.000000e+00 : f32
    %129 = vector.broadcast %cst_51 : f32 to vector<8x128xf32>
    %130 = arith.divf %129, %128 : vector<8x128xf32>
    %131 = vector.extract_strided_slice %122 {offsets = [0, 128], sizes = [8, 128], strides = [1, 1]} : vector<8x512xf32> to vector<8x128xf32>
    %cst_52 = arith.constant 0.000000e+00 : f32
    %132 = vector.broadcast %cst_52 : f32 to vector<8x128xf32>
    %133 = arith.subf %132, %131 : vector<8x128xf32>
    %134 = math.exp %133 : vector<8x128xf32>
    %cst_53 = arith.constant 1.000000e+00 : f32
    %135 = vector.broadcast %cst_53 : f32 to vector<8x128xf32>
    %136 = arith.addf %135, %134 : vector<8x128xf32>
    %cst_54 = arith.constant 1.000000e+00 : f32
    %137 = vector.broadcast %cst_54 : f32 to vector<8x128xf32>
    %138 = arith.divf %137, %136 : vector<8x128xf32>
    %139 = vector.extract_strided_slice %122 {offsets = [0, 256], sizes = [8, 128], strides = [1, 1]} : vector<8x512xf32> to vector<8x128xf32>
    %cst_55 = arith.constant 0.000000e+00 : f32
    %140 = vector.broadcast %cst_55 : f32 to vector<8x128xf32>
    %141 = arith.subf %140, %139 : vector<8x128xf32>
    %142 = math.exp %141 : vector<8x128xf32>
    %cst_56 = arith.constant 1.000000e+00 : f32
    %143 = vector.broadcast %cst_56 : f32 to vector<8x128xf32>
    %144 = arith.addf %143, %142 : vector<8x128xf32>
    %cst_57 = arith.constant 1.000000e+00 : f32
    %145 = vector.broadcast %cst_57 : f32 to vector<8x128xf32>
    %146 = arith.divf %145, %144 : vector<8x128xf32>
    %147 = vector.extract_strided_slice %122 {offsets = [0, 384], sizes = [8, 128], strides = [1, 1]} : vector<8x512xf32> to vector<8x128xf32>
    %148 = math.tanh %147 : vector<8x128xf32>
    %149 = arith.mulf %138, %115 : vector<8x128xf32>
    %150 = arith.mulf %130, %148 : vector<8x128xf32>
    %151 = arith.addf %149, %150 : vector<8x128xf32>
    %152 = math.tanh %151 : vector<8x128xf32>
    %153 = arith.mulf %146, %152 : vector<8x128xf32>
    %154 = arith.addf %118, %153 : vector<8x128xf32>
    %155 = arith.maximumf %119, %153 : vector<8x128xf32>
    %c32 = arith.constant 32 : index
    %c0_58 = arith.constant 0 : index
    %156 = vector.load %arg10[%c32, %c0_58] : memref<64x512xf32, #tpu.memory_space<vmem>>, vector<8x512xf32>
    %cst_59 = arith.constant dense<0.000000e+00> : vector<8x512xf32>
    %157 = tpu.matmul %153, %7, %cst_59 {dimension_numbers = #tpu.dot_dimension_numbers<[1], [0], [0], [1], [0, 0, 1, 1], [], []>} : vector<8x128xf32>, vector<128x512xf32>, vector<8x512xf32> -> vector<8x512xf32>
    %158 = arith.addf %156, %157 : vector<8x512xf32>
    %159 = vector.extract_strided_slice %158 {offsets = [0, 0], sizes = [8, 128], strides = [1, 1]} : vector<8x512xf32> to vector<8x128xf32>
    %cst_60 = arith.constant 0.000000e+00 : f32
    %160 = vector.broadcast %cst_60 : f32 to vector<8x128xf32>
    %161 = arith.subf %160, %159 : vector<8x128xf32>
    %162 = math.exp %161 : vector<8x128xf32>
    %cst_61 = arith.constant 1.000000e+00 : f32
    %163 = vector.broadcast %cst_61 : f32 to vector<8x128xf32>
    %164 = arith.addf %163, %162 : vector<8x128xf32>
    %cst_62 = arith.constant 1.000000e+00 : f32
    %165 = vector.broadcast %cst_62 : f32 to vector<8x128xf32>
    %166 = arith.divf %165, %164 : vector<8x128xf32>
    %167 = vector.extract_strided_slice %158 {offsets = [0, 128], sizes = [8, 128], strides = [1, 1]} : vector<8x512xf32> to vector<8x128xf32>
    %cst_63 = arith.constant 0.000000e+00 : f32
    %168 = vector.broadcast %cst_63 : f32 to vector<8x128xf32>
    %169 = arith.subf %168, %167 : vector<8x128xf32>
    %170 = math.exp %169 : vector<8x128xf32>
    %cst_64 = arith.constant 1.000000e+00 : f32
    %171 = vector.broadcast %cst_64 : f32 to vector<8x128xf32>
    %172 = arith.addf %171, %170 : vector<8x128xf32>
    %cst_65 = arith.constant 1.000000e+00 : f32
    %173 = vector.broadcast %cst_65 : f32 to vector<8x128xf32>
    %174 = arith.divf %173, %172 : vector<8x128xf32>
    %175 = vector.extract_strided_slice %158 {offsets = [0, 256], sizes = [8, 128], strides = [1, 1]} : vector<8x512xf32> to vector<8x128xf32>
    %cst_66 = arith.constant 0.000000e+00 : f32
    %176 = vector.broadcast %cst_66 : f32 to vector<8x128xf32>
    %177 = arith.subf %176, %175 : vector<8x128xf32>
    %178 = math.exp %177 : vector<8x128xf32>
    %cst_67 = arith.constant 1.000000e+00 : f32
    %179 = vector.broadcast %cst_67 : f32 to vector<8x128xf32>
    %180 = arith.addf %179, %178 : vector<8x128xf32>
    %cst_68 = arith.constant 1.000000e+00 : f32
    %181 = vector.broadcast %cst_68 : f32 to vector<8x128xf32>
    %182 = arith.divf %181, %180 : vector<8x128xf32>
    %183 = vector.extract_strided_slice %158 {offsets = [0, 384], sizes = [8, 128], strides = [1, 1]} : vector<8x512xf32> to vector<8x128xf32>
    %184 = math.tanh %183 : vector<8x128xf32>
    %185 = arith.mulf %174, %151 : vector<8x128xf32>
    %186 = arith.mulf %166, %184 : vector<8x128xf32>
    %187 = arith.addf %185, %186 : vector<8x128xf32>
    %188 = math.tanh %187 : vector<8x128xf32>
    %189 = arith.mulf %182, %188 : vector<8x128xf32>
    %190 = arith.addf %154, %189 : vector<8x128xf32>
    %191 = arith.maximumf %155, %189 : vector<8x128xf32>
    %c40 = arith.constant 40 : index
    %c0_69 = arith.constant 0 : index
    %192 = vector.load %arg10[%c40, %c0_69] : memref<64x512xf32, #tpu.memory_space<vmem>>, vector<8x512xf32>
    %cst_70 = arith.constant dense<0.000000e+00> : vector<8x512xf32>
    %193 = tpu.matmul %189, %7, %cst_70 {dimension_numbers = #tpu.dot_dimension_numbers<[1], [0], [0], [1], [0, 0, 1, 1], [], []>} : vector<8x128xf32>, vector<128x512xf32>, vector<8x512xf32> -> vector<8x512xf32>
    %194 = arith.addf %192, %193 : vector<8x512xf32>
    %195 = vector.extract_strided_slice %194 {offsets = [0, 0], sizes = [8, 128], strides = [1, 1]} : vector<8x512xf32> to vector<8x128xf32>
    %cst_71 = arith.constant 0.000000e+00 : f32
    %196 = vector.broadcast %cst_71 : f32 to vector<8x128xf32>
    %197 = arith.subf %196, %195 : vector<8x128xf32>
    %198 = math.exp %197 : vector<8x128xf32>
    %cst_72 = arith.constant 1.000000e+00 : f32
    %199 = vector.broadcast %cst_72 : f32 to vector<8x128xf32>
    %200 = arith.addf %199, %198 : vector<8x128xf32>
    %cst_73 = arith.constant 1.000000e+00 : f32
    %201 = vector.broadcast %cst_73 : f32 to vector<8x128xf32>
    %202 = arith.divf %201, %200 : vector<8x128xf32>
    %203 = vector.extract_strided_slice %194 {offsets = [0, 128], sizes = [8, 128], strides = [1, 1]} : vector<8x512xf32> to vector<8x128xf32>
    %cst_74 = arith.constant 0.000000e+00 : f32
    %204 = vector.broadcast %cst_74 : f32 to vector<8x128xf32>
    %205 = arith.subf %204, %203 : vector<8x128xf32>
    %206 = math.exp %205 : vector<8x128xf32>
    %cst_75 = arith.constant 1.000000e+00 : f32
    %207 = vector.broadcast %cst_75 : f32 to vector<8x128xf32>
    %208 = arith.addf %207, %206 : vector<8x128xf32>
    %cst_76 = arith.constant 1.000000e+00 : f32
    %209 = vector.broadcast %cst_76 : f32 to vector<8x128xf32>
    %210 = arith.divf %209, %208 : vector<8x128xf32>
    %211 = vector.extract_strided_slice %194 {offsets = [0, 256], sizes = [8, 128], strides = [1, 1]} : vector<8x512xf32> to vector<8x128xf32>
    %cst_77 = arith.constant 0.000000e+00 : f32
    %212 = vector.broadcast %cst_77 : f32 to vector<8x128xf32>
    %213 = arith.subf %212, %211 : vector<8x128xf32>
    %214 = math.exp %213 : vector<8x128xf32>
    %cst_78 = arith.constant 1.000000e+00 : f32
    %215 = vector.broadcast %cst_78 : f32 to vector<8x128xf32>
    %216 = arith.addf %215, %214 : vector<8x128xf32>
    %cst_79 = arith.constant 1.000000e+00 : f32
    %217 = vector.broadcast %cst_79 : f32 to vector<8x128xf32>
    %218 = arith.divf %217, %216 : vector<8x128xf32>
    %219 = vector.extract_strided_slice %194 {offsets = [0, 384], sizes = [8, 128], strides = [1, 1]} : vector<8x512xf32> to vector<8x128xf32>
    %220 = math.tanh %219 : vector<8x128xf32>
    %221 = arith.mulf %210, %187 : vector<8x128xf32>
    %222 = arith.mulf %202, %220 : vector<8x128xf32>
    %223 = arith.addf %221, %222 : vector<8x128xf32>
    %224 = math.tanh %223 : vector<8x128xf32>
    %225 = arith.mulf %218, %224 : vector<8x128xf32>
    %226 = arith.addf %190, %225 : vector<8x128xf32>
    %227 = arith.maximumf %191, %225 : vector<8x128xf32>
    %c48 = arith.constant 48 : index
    %c0_80 = arith.constant 0 : index
    %228 = vector.load %arg10[%c48, %c0_80] : memref<64x512xf32, #tpu.memory_space<vmem>>, vector<8x512xf32>
    %cst_81 = arith.constant dense<0.000000e+00> : vector<8x512xf32>
    %229 = tpu.matmul %225, %7, %cst_81 {dimension_numbers = #tpu.dot_dimension_numbers<[1], [0], [0], [1], [0, 0, 1, 1], [], []>} : vector<8x128xf32>, vector<128x512xf32>, vector<8x512xf32> -> vector<8x512xf32>
    %230 = arith.addf %228, %229 : vector<8x512xf32>
    %231 = vector.extract_strided_slice %230 {offsets = [0, 0], sizes = [8, 128], strides = [1, 1]} : vector<8x512xf32> to vector<8x128xf32>
    %cst_82 = arith.constant 0.000000e+00 : f32
    %232 = vector.broadcast %cst_82 : f32 to vector<8x128xf32>
    %233 = arith.subf %232, %231 : vector<8x128xf32>
    %234 = math.exp %233 : vector<8x128xf32>
    %cst_83 = arith.constant 1.000000e+00 : f32
    %235 = vector.broadcast %cst_83 : f32 to vector<8x128xf32>
    %236 = arith.addf %235, %234 : vector<8x128xf32>
    %cst_84 = arith.constant 1.000000e+00 : f32
    %237 = vector.broadcast %cst_84 : f32 to vector<8x128xf32>
    %238 = arith.divf %237, %236 : vector<8x128xf32>
    %239 = vector.extract_strided_slice %230 {offsets = [0, 128], sizes = [8, 128], strides = [1, 1]} : vector<8x512xf32> to vector<8x128xf32>
    %cst_85 = arith.constant 0.000000e+00 : f32
    %240 = vector.broadcast %cst_85 : f32 to vector<8x128xf32>
    %241 = arith.subf %240, %239 : vector<8x128xf32>
    %242 = math.exp %241 : vector<8x128xf32>
    %cst_86 = arith.constant 1.000000e+00 : f32
    %243 = vector.broadcast %cst_86 : f32 to vector<8x128xf32>
    %244 = arith.addf %243, %242 : vector<8x128xf32>
    %cst_87 = arith.constant 1.000000e+00 : f32
    %245 = vector.broadcast %cst_87 : f32 to vector<8x128xf32>
    %246 = arith.divf %245, %244 : vector<8x128xf32>
    %247 = vector.extract_strided_slice %230 {offsets = [0, 256], sizes = [8, 128], strides = [1, 1]} : vector<8x512xf32> to vector<8x128xf32>
    %cst_88 = arith.constant 0.000000e+00 : f32
    %248 = vector.broadcast %cst_88 : f32 to vector<8x128xf32>
    %249 = arith.subf %248, %247 : vector<8x128xf32>
    %250 = math.exp %249 : vector<8x128xf32>
    %cst_89 = arith.constant 1.000000e+00 : f32
    %251 = vector.broadcast %cst_89 : f32 to vector<8x128xf32>
    %252 = arith.addf %251, %250 : vector<8x128xf32>
    %cst_90 = arith.constant 1.000000e+00 : f32
    %253 = vector.broadcast %cst_90 : f32 to vector<8x128xf32>
    %254 = arith.divf %253, %252 : vector<8x128xf32>
    %255 = vector.extract_strided_slice %230 {offsets = [0, 384], sizes = [8, 128], strides = [1, 1]} : vector<8x512xf32> to vector<8x128xf32>
    %256 = math.tanh %255 : vector<8x128xf32>
    %257 = arith.mulf %246, %223 : vector<8x128xf32>
    %258 = arith.mulf %238, %256 : vector<8x128xf32>
    %259 = arith.addf %257, %258 : vector<8x128xf32>
    %260 = math.tanh %259 : vector<8x128xf32>
    %261 = arith.mulf %254, %260 : vector<8x128xf32>
    %262 = arith.addf %226, %261 : vector<8x128xf32>
    %263 = arith.maximumf %227, %261 : vector<8x128xf32>
    %c56 = arith.constant 56 : index
    %c0_91 = arith.constant 0 : index
    %264 = vector.load %arg10[%c56, %c0_91] : memref<64x512xf32, #tpu.memory_space<vmem>>, vector<8x512xf32>
    %cst_92 = arith.constant dense<0.000000e+00> : vector<8x512xf32>
    %265 = tpu.matmul %261, %7, %cst_92 {dimension_numbers = #tpu.dot_dimension_numbers<[1], [0], [0], [1], [0, 0, 1, 1], [], []>} : vector<8x128xf32>, vector<128x512xf32>, vector<8x512xf32> -> vector<8x512xf32>
    %266 = arith.addf %264, %265 : vector<8x512xf32>
    %267 = vector.extract_strided_slice %266 {offsets = [0, 0], sizes = [8, 128], strides = [1, 1]} : vector<8x512xf32> to vector<8x128xf32>
    %cst_93 = arith.constant 0.000000e+00 : f32
    %268 = vector.broadcast %cst_93 : f32 to vector<8x128xf32>
    %269 = arith.subf %268, %267 : vector<8x128xf32>
    %270 = math.exp %269 : vector<8x128xf32>
    %cst_94 = arith.constant 1.000000e+00 : f32
    %271 = vector.broadcast %cst_94 : f32 to vector<8x128xf32>
    %272 = arith.addf %271, %270 : vector<8x128xf32>
    %cst_95 = arith.constant 1.000000e+00 : f32
    %273 = vector.broadcast %cst_95 : f32 to vector<8x128xf32>
    %274 = arith.divf %273, %272 : vector<8x128xf32>
    %275 = vector.extract_strided_slice %266 {offsets = [0, 128], sizes = [8, 128], strides = [1, 1]} : vector<8x512xf32> to vector<8x128xf32>
    %cst_96 = arith.constant 0.000000e+00 : f32
    %276 = vector.broadcast %cst_96 : f32 to vector<8x128xf32>
    %277 = arith.subf %276, %275 : vector<8x128xf32>
    %278 = math.exp %277 : vector<8x128xf32>
    %cst_97 = arith.constant 1.000000e+00 : f32
    %279 = vector.broadcast %cst_97 : f32 to vector<8x128xf32>
    %280 = arith.addf %279, %278 : vector<8x128xf32>
    %cst_98 = arith.constant 1.000000e+00 : f32
    %281 = vector.broadcast %cst_98 : f32 to vector<8x128xf32>
    %282 = arith.divf %281, %280 : vector<8x128xf32>
    %283 = vector.extract_strided_slice %266 {offsets = [0, 256], sizes = [8, 128], strides = [1, 1]} : vector<8x512xf32> to vector<8x128xf32>
    %cst_99 = arith.constant 0.000000e+00 : f32
    %284 = vector.broadcast %cst_99 : f32 to vector<8x128xf32>
    %285 = arith.subf %284, %283 : vector<8x128xf32>
    %286 = math.exp %285 : vector<8x128xf32>
    %cst_100 = arith.constant 1.000000e+00 : f32
    %287 = vector.broadcast %cst_100 : f32 to vector<8x128xf32>
    %288 = arith.addf %287, %286 : vector<8x128xf32>
    %cst_101 = arith.constant 1.000000e+00 : f32
    %289 = vector.broadcast %cst_101 : f32 to vector<8x128xf32>
    %290 = arith.divf %289, %288 : vector<8x128xf32>
    %291 = vector.extract_strided_slice %266 {offsets = [0, 384], sizes = [8, 128], strides = [1, 1]} : vector<8x512xf32> to vector<8x128xf32>
    %292 = math.tanh %291 : vector<8x128xf32>
    %293 = arith.mulf %282, %259 : vector<8x128xf32>
    %294 = arith.mulf %274, %292 : vector<8x128xf32>
    %295 = arith.addf %293, %294 : vector<8x128xf32>
    %296 = math.tanh %295 : vector<8x128xf32>
    %297 = arith.mulf %290, %296 : vector<8x128xf32>
    %298 = arith.addf %262, %297 : vector<8x128xf32>
    %299 = arith.maximumf %263, %297 : vector<8x128xf32>
    %c0_102 = arith.constant 0 : index
    %c0_103 = arith.constant 0 : index
    %300 = vector.load %arg4[%c0_102, %c0_103] : memref<128x64xf32, #tpu.memory_space<vmem>>, vector<128x64xf32>
    %cst_104 = arith.constant dense<0.000000e+00> : vector<8x64xf32>
    %301 = tpu.matmul %298, %300, %cst_104 {dimension_numbers = #tpu.dot_dimension_numbers<[1], [0], [0], [1], [0, 0, 1, 1], [], []>} : vector<8x128xf32>, vector<128x64xf32>, vector<8x64xf32> -> vector<8x64xf32>
    %cst_105 = arith.constant 1.250000e-01 : f32
    %302 = vector.broadcast %cst_105 : f32 to vector<8x64xf32>
    %303 = arith.mulf %301, %302 : vector<8x64xf32>
    %c0_106 = arith.constant 0 : index
    %c0_107 = arith.constant 0 : index
    %304 = vector.load %arg5[%c0_106, %c0_107] : memref<128x64xf32, #tpu.memory_space<vmem>>, vector<128x64xf32>
    %cst_108 = arith.constant dense<0.000000e+00> : vector<8x64xf32>
    %305 = tpu.matmul %299, %304, %cst_108 {dimension_numbers = #tpu.dot_dimension_numbers<[1], [0], [0], [1], [0, 0, 1, 1], [], []>} : vector<8x128xf32>, vector<128x64xf32>, vector<8x64xf32> -> vector<8x64xf32>
    %306 = arith.addf %303, %305 : vector<8x64xf32>
    %c0_109 = arith.constant 0 : index
    %c0_110 = arith.constant 0 : index
    %307 = vector.load %arg6[%c0_109, %c0_110] : memref<1x64xf32, #tpu.memory_space<vmem>>, vector<1x64xf32>
    %308 = vector.broadcast %307 : vector<1x64xf32> to vector<8x64xf32>
    %309 = arith.addf %306, %308 : vector<8x64xf32>
    %cst_111 = arith.constant 0.000000e+00 : f32
    %310 = vector.broadcast %cst_111 : f32 to vector<8x64xf32>
    %311 = arith.maximumf %309, %310 : vector<8x64xf32>
    %c0_112 = arith.constant 0 : index
    %c0_113 = arith.constant 0 : index
    %312 = vector.load %arg7[%c0_112, %c0_113] : memref<64x128xf32, #tpu.memory_space<vmem>>, vector<64x128xf32>
    %cst_114 = arith.constant dense<0.000000e+00> : vector<8x128xf32>
    %313 = tpu.matmul %311, %312, %cst_114 {dimension_numbers = #tpu.dot_dimension_numbers<[1], [0], [0], [1], [0, 0, 1, 1], [], []>} : vector<8x64xf32>, vector<64x128xf32>, vector<8x128xf32> -> vector<8x128xf32>
    %c0_115 = arith.constant 0 : index
    %c0_116 = arith.constant 0 : index
    %314 = vector.load %arg8[%c0_115, %c0_116] : memref<1x128xf32, #tpu.memory_space<vmem>>, vector<1x128xf32>
    %315 = vector.broadcast %314 : vector<1x128xf32> to vector<8x128xf32>
    %316 = arith.addf %313, %315 : vector<8x128xf32>
    %cst_117 = arith.constant 0.000000e+00 : f32
    %317 = vector.broadcast %cst_117 : f32 to vector<8x128xf32>
    %318 = arith.subf %317, %316 : vector<8x128xf32>
    %319 = math.exp %318 : vector<8x128xf32>
    %cst_118 = arith.constant 1.000000e+00 : f32
    %320 = vector.broadcast %cst_118 : f32 to vector<8x128xf32>
    %321 = arith.addf %320, %319 : vector<8x128xf32>
    %cst_119 = arith.constant 1.000000e+00 : f32
    %322 = vector.broadcast %cst_119 : f32 to vector<8x128xf32>
    %323 = arith.divf %322, %321 : vector<8x128xf32>
    %c0_120 = arith.constant 0 : index
    %c0_121 = arith.constant 0 : index
    %324 = vector.load %arg9[%c0_120, %c0_121] : memref<8x128xf32, #tpu.memory_space<vmem>>, vector<8x128xf32>
    tpu.vector_store %arg9[%c0_120, %c0_121], %323 {strides = array<i32>} : memref<8x128xf32, #tpu.memory_space<vmem>>, vector<8x128xf32>,
    return
  }
}

</mosaic_0001>

<llo_original>
// kernel: bilstm_forward.1
$region0: #{bilstm_forward.1}
  #allocation0 [shape = 'u32[]', space=smem, size = 0x4, offset = 0x4, fixed_abs, tag = 'smem constant byte address 0x4 - core index']
  #allocation1 [shape = 'u32[72,128]{1,0:T(1,128)}', space=vmem, size = 0x9000, scoped, tag = 'internal scratch']
  #allocation2 [shape = 'f32[64,512]{1,0:T(8,128)}', space=vmem, size = 0x20000, scoped, tag = 'scratch operand']
  %s0 = inlined_call_operand.vmem [shape: f32[64,64], index: 0, kind: input, shape index: {}]
  %s1 = inlined_call_operand.vmem [shape: f32[64,512], index: 1, kind: input, shape index: {}]
  %s2 = inlined_call_operand.vmem [shape: f32[128,512], index: 2, kind: input, shape index: {}]
  %s3 = inlined_call_operand.vmem [shape: f32[1,512], index: 3, kind: input, shape index: {}]
  %s4 = inlined_call_operand.vmem [shape: f32[128,64], index: 4, kind: input, shape index: {}]
  %s5 = inlined_call_operand.vmem [shape: f32[128,64], index: 5, kind: input, shape index: {}]
  %s6 = inlined_call_operand.vmem [shape: f32[1,64], index: 6, kind: input, shape index: {}]
  %s7 = inlined_call_operand.vmem [shape: f32[64,128], index: 7, kind: input, shape index: {}]
  %s8 = inlined_call_operand.vmem [shape: f32[1,128], index: 8, kind: input, shape index: {}]
  %s9 = inlined_call_operand.vmem [shape: f32[8,128], index: 9, kind: output, shape index: {}]
  %s10 = sld [smem:[#allocation0]]
  $region46: #{bilstm_forward.1} parent=0
    _
  %s12 = ssub.s32 1, %s10
  %s13 = scalar_select 0, %s12, %s10
  // Predicated region
  $region2: #{bilstm_forward.1} parent=0 // pred_check
    _
  $region3: #{bilstm_forward.1} parent=0 // pred_check_branch
    %15 = sbr.rel (0) target = $region5
  $region4: #{bilstm_forward.1} parent=0 // pred_region
    _
  $region5: #{bilstm_forward.1} parent=0 // pred_fallthru
    _
  // Predicated region
  $region6: #{bilstm_forward.1} parent=0 // pred_check
    _
  $region7: #{bilstm_forward.1} parent=0 // pred_check_branch
    %17 = sbr.rel (0) target = $region9
  $region8: #{bilstm_forward.1} parent=0 // pred_region
    _
  $region9: #{bilstm_forward.1} parent=0 // pred_fallthru
    _
  // Predicated region
  $region10: #{bilstm_forward.1} parent=0 // pred_check
    _
  $region11: #{bilstm_forward.1} parent=0 // pred_check_branch
    %19 = sbr.rel (0) target = $region13
  $region12: #{bilstm_forward.1} parent=0 // pred_region
    _
  $region13: #{bilstm_forward.1} parent=0 // pred_fallthru
    _
  // Predicated region
  $region14: #{bilstm_forward.1} parent=0 // pred_check
    _
  $region15: #{bilstm_forward.1} parent=0 // pred_check_branch
    %21 = sbr.rel (0) target = $region17
  $region16: #{bilstm_forward.1} parent=0 // pred_region
    _
  $region17: #{bilstm_forward.1} parent=0 // pred_fallthru
    _
  // Predicated region
  $region18: #{bilstm_forward.1} parent=0 // pred_check
    _
  $region19: #{bilstm_forward.1} parent=0 // pred_check_branch
    %23 = sbr.rel (0) target = $region21
  $region20: #{bilstm_forward.1} parent=0 // pred_region
    _
  $region21: #{bilstm_forward.1} parent=0 // pred_fallthru
    _
  // Predicated region
  $region22: #{bilstm_forward.1} parent=0 // pred_check
    _
  $region23: #{bilstm_forward.1} parent=0 // pred_check_branch
    %25 = sbr.rel (0) target = $region25
  $region24: #{bilstm_forward.1} parent=0 // pred_region
    _
  $region25: #{bilstm_forward.1} parent=0 // pred_fallthru
    _
  // Predicated region
  $region26: #{bilstm_forward.1} parent=0 // pred_check
    _
  $region27: #{bilstm_forward.1} parent=0 // pred_check_branch
    %27 = sbr.rel (0) target = $region29
  $region28: #{bilstm_forward.1} parent=0 // pred_region
    _
  $region29: #{bilstm_forward.1} parent=0 // pred_fallthru
    _
  // Predicated region
  $region30: #{bilstm_forward.1} parent=0 // pred_check
    _
  $region31: #{bilstm_forward.1} parent=0 // pred_check_branch
    %29 = sbr.rel (0) target = $region33
  $region32: #{bilstm_forward.1} parent=0 // pred_region
    _
  $region33: #{bilstm_forward.1} parent=0 // pred_fallthru
    _
  // Predicated region
  $region34: #{bilstm_forward.1} parent=0 // pred_check
    _
  $region35: #{bilstm_forward.1} parent=0 // pred_check_branch
    %31 = sbr.rel (0) target = $region37
  $region36: #{bilstm_forward.1} parent=0 // pred_region
    _
  $region37: #{bilstm_forward.1} parent=0 // pred_fallthru
    _
  %v32 = vld [vmem:[%s0] sm:$0xff]
  %v33 = vld [vmem:[%s0 + $0x8] sm:$0xff]
  %v34 = vld [vmem:[%s0 + $0x10] sm:$0xff]
  %v35 = vld [vmem:[%s0 + $0x18] sm:$0xff]
  %v36 = vld [vmem:[%s0 + $0x20] sm:$0xff]
  %v37 = vld [vmem:[%s0 + $0x28] sm:$0xff]
  %v38 = vld [vmem:[%s0 + $0x30] sm:$0xff]
  %v39 = vld [vmem:[%s0 + $0x38] sm:$0xff]
  %v40 = vld [vmem:[%s1] sm:$0xff]
  %v41 = vld [vmem:[%s1 + $0x8] sm:$0xff]
  %v42 = vld [vmem:[%s1 + $0x10] sm:$0xff]
  %v43 = vld [vmem:[%s1 + $0x18] sm:$0xff]
  %v44 = vld [vmem:[%s1 + $0x20] sm:$0xff]
  %v45 = vld [vmem:[%s1 + $0x28] sm:$0xff]
  %v46 = vld [vmem:[%s1 + $0x30] sm:$0xff]
  %v47 = vld [vmem:[%s1 + $0x38] sm:$0xff]
  %v48 = vld [vmem:[%s1 + $0x40] sm:$0xff]
  %v49 = vld [vmem:[%s1 + $0x48] sm:$0xff]
  %v50 = vld [vmem:[%s1 + $0x50] sm:$0xff]
  %v51 = vld [vmem:[%s1 + $0x58] sm:$0xff]
  %v52 = vld [vmem:[%s1 + $0x60] sm:$0xff]
  %v53 = vld [vmem:[%s1 + $0x68] sm:$0xff]
  %v54 = vld [vmem:[%s1 + $0x70] sm:$0xff]
  %v55 = vld [vmem:[%s1 + $0x78] sm:$0xff]
  %v56 = vld [vmem:[%s1 + $0x80] sm:$0xff]
  %v57 = vld [vmem:[%s1 + $0x88] sm:$0xff]
  %v58 = vld [vmem:[%s1 + $0x90] sm:$0xff]
  %v59 = vld [vmem:[%s1 + $0x98] sm:$0xff]
  %v60 = vld [vmem:[%s1 + $0xa0] sm:$0xff]
  %v61 = vld [vmem:[%s1 + $0xa8] sm:$0xff]
  %v62 = vld [vmem:[%s1 + $0xb0] sm:$0xff]
  %v63 = vld [vmem:[%s1 + $0xb8] sm:$0xff]
  %v64 = vld [vmem:[%s1 + $0xc0] sm:$0xff]
  %v65 = vld [vmem:[%s1 + $0xc8] sm:$0xff]
  %v66 = vld [vmem:[%s1 + $0xd0] sm:$0xff]
  %v67 = vld [vmem:[%s1 + $0xd8] sm:$0xff]
  %v68 = vld [vmem:[%s1 + $0xe0] sm:$0xff]
  %v69 = vld [vmem:[%s1 + $0xe8] sm:$0xff]
  %v70 = vld [vmem:[%s1 + $0xf0] sm:$0xff]
  %v71 = vld [vmem:[%s1 + $0xf8] sm:$0xff]
  %v72 = vld [vmem:[%s3] sm:$0xf]
  %v74 = vperm.slane %v72, 0
  %v75 = vperm.slane %v72, 1
  %v76 = vperm.slane %v72, 2
  %v77 = vperm.slane %v72, 3
  %vm82 = vcmask 523264
  %v84 = vsel %vm82, %v32, 0
  %v87 = vsel %vm82, %v33, 0
  %v90 = vsel %vm82, %v34, 0
  %v93 = vsel %vm82, %v35, 0
  %v96 = vsel %vm82, %v36, 0
  %v99 = vsel %vm82, %v37, 0
  %v102 = vsel %vm82, %v38, 0
  %v105 = vsel %vm82, %v39, 0
  %107 = vmatpush.msra.mxu0 0.0
  %108 = vmatpush.msra.mxu0 0.0
  %109 = vmatpush.msra.mxu0 0.0
  %110 = vmatpush.msra.mxu0 0.0
  %111 = vmatpush.msra.mxu0 0.0
  %112 = vmatpush.msra.mxu0 0.0
  %113 = vmatpush.msra.mxu0 0.0
  %114 = vmatpush.msra.mxu0 0.0
  %115 = vmatpush.msra.mxu0 %v68
  %116 = vmatpush.msra.mxu0 %v64
  %117 = vmatpush.msra.mxu0 %v60
  %118 = vmatpush.msra.mxu0 %v56
  %119 = vmatpush.msra.mxu0 %v52
  %120 = vmatpush.msra.mxu0 %v48
  %121 = vmatpush.msra.mxu0 %v44
  %122 = vmatpush.msra.mxu0 %v40
  %123 = vmatmul.f32.gmra.mxu0 %v84
  %v124 = vpop.f32.mrf.mxu0
  %v125 = vadd.f32 %v74, %v124
  %126 = vmatmul.f32.gmra.mxu0 %v87
  %v127 = vpop.f32.mrf.mxu0
  %v128 = vadd.f32 %v74, %v127
  %129 = vmatmul.f32.gmra.mxu0 %v90
  %v130 = vpop.f32.mrf.mxu0
  %v131 = vadd.f32 %v74, %v130
  %132 = vmatmul.f32.gmra.mxu0 %v93
  %v133 = vpop.f32.mrf.mxu0
  %v134 = vadd.f32 %v74, %v133
  %135 = vmatmul.f32.gmra.mxu0 %v96
  %v136 = vpop.f32.mrf.mxu0
  %v137 = vadd.f32 %v74, %v136
  %138 = vmatmul.f32.gmra.mxu0 %v99
  %v139 = vpop.f32.mrf.mxu0
  %v140 = vadd.f32 %v74, %v139
  %141 = vmatmul.f32.gmra.mxu0 %v102
  %v142 = vpop.f32.mrf.mxu0
  %v143 = vadd.f32 %v74, %v142
  %144 = vmatmul.f32.gmra.mxu0 %v105
  %v145 = vpop.f32.mrf.mxu0
  %v146 = vadd.f32 %v74, %v145
  %147 = vdwg.mxu0
  %148 = vmatpush.msra.mxu0 0.0
  %149 = vmatpush.msra.mxu0 0.0
  %150 = vmatpush.msra.mxu0 0.0
  %151 = vmatpush.msra.mxu0 0.0
  %152 = vmatpush.msra.mxu0 0.0
  %153 = vmatpush.msra.mxu0 0.0
  %154 = vmatpush.msra.mxu0 0.0
  %155 = vmatpush.msra.mxu0 0.0
  %156 = vmatpush.msra.mxu0 %v69
  %157 = vmatpush.msra.mxu0 %v65
  %158 = vmatpush.msra.mxu0 %v61
  %159 = vmatpush.msra.mxu0 %v57
  %160 = vmatpush.msra.mxu0 %v53
  %161 = vmatpush.msra.mxu0 %v49
  %162 = vmatpush.msra.mxu0 %v45
  %163 = vmatpush.msra.mxu0 %v41
  %164 = vmatmul.f32.gmra.mxu0 %v84
  %v165 = vpop.f32.mrf.mxu0
  %v166 = vadd.f32 %v75, %v165
  %167 = vmatmul.f32.gmra.mxu0 %v87
  %v168 = vpop.f32.mrf.mxu0
  %v169 = vadd.f32 %v75, %v168
  %170 = vmatmul.f32.gmra.mxu0 %v90
  %v171 = vpop.f32.mrf.mxu0
  %v172 = vadd.f32 %v75, %v171
  %173 = vmatmul.f32.gmra.mxu0 %v93
  %v174 = vpop.f32.mrf.mxu0
  %v175 = vadd.f32 %v75, %v174
  %176 = vmatmul.f32.gmra.mxu0 %v96
  %v177 = vpop.f32.mrf.mxu0
  %v178 = vadd.f32 %v75, %v177
  %179 = vmatmul.f32.gmra.mxu0 %v99
  %v180 = vpop.f32.mrf.mxu0
  %v181 = vadd.f32 %v75, %v180
  %182 = vmatmul.f32.gmra.mxu0 %v102
  %v183 = vpop.f32.mrf.mxu0
  %v184 = vadd.f32 %v75, %v183
  %185 = vmatmul.f32.gmra.mxu0 %v105
  %v186 = vpop.f32.mrf.mxu0
  %v187 = vadd.f32 %v75, %v186
  %188 = vdwg.mxu0
  %189 = vmatpush.msra.mxu0 0.0
  %190 = vmatpush.msra.mxu0 0.0
  %191 = vmatpush.msra.mxu0 0.0
  %192 = vmatpush.msra.mxu0 0.0
  %193 = vmatpush.msra.mxu0 0.0
  %194 = vmatpush.msra.mxu0 0.0
  %195 = vmatpush.msra.mxu0 0.0
  %196 = vmatpush.msra.mxu0 0.0
  %197 = vmatpush.msra.mxu0 %v70
  %198 = vmatpush.msra.mxu0 %v66
  %199 = vmatpush.msra.mxu0 %v62
  %200 = vmatpush.msra.mxu0 %v58
  %201 = vmatpush.msra.mxu0 %v54
  %202 = vmatpush.msra.mxu0 %v50
  %203 = vmatpush.msra.mxu0 %v46
  %204 = vmatpush.msra.mxu0 %v42
  %205 = vmatmul.f32.gmra.mxu0 %v84
  %v206 = vpop.f32.mrf.mxu0
  %v207 = vadd.f32 %v76, %v206
  %208 = vmatmul.f32.gmra.mxu0 %v87
  %v209 = vpop.f32.mrf.mxu0
  %v210 = vadd.f32 %v76, %v209
  %211 = vmatmul.f32.gmra.mxu0 %v90
  %v212 = vpop.f32.mrf.mxu0
  %v213 = vadd.f32 %v76, %v212
  %214 = vmatmul.f32.gmra.mxu0 %v93
  %v215 = vpop.f32.mrf.mxu0
  %v216 = vadd.f32 %v76, %v215
  %217 = vmatmul.f32.gmra.mxu0 %v96
  %v218 = vpop.f32.mrf.mxu0
  %v219 = vadd.f32 %v76, %v218
  %220 = vmatmul.f32.gmra.mxu0 %v99
  %v221 = vpop.f32.mrf.mxu0
  %v222 = vadd.f32 %v76, %v221
  %223 = vmatmul.f32.gmra.mxu0 %v102
  %v224 = vpop.f32.mrf.mxu0
  %v225 = vadd.f32 %v76, %v224
  %226 = vmatmul.f32.gmra.mxu0 %v105
  %v227 = vpop.f32.mrf.mxu0
  %v228 = vadd.f32 %v76, %v227
  %229 = vdwg.mxu0
  %230 = vmatpush.msra.mxu0 0.0
  %231 = vmatpush.msra.mxu0 0.0
  %232 = vmatpush.msra.mxu0 0.0
  %233 = vmatpush.msra.mxu0 0.0
  %234 = vmatpush.msra.mxu0 0.0
  %235 = vmatpush.msra.mxu0 0.0
  %236 = vmatpush.msra.mxu0 0.0
  %237 = vmatpush.msra.mxu0 0.0
  %238 = vmatpush.msra.mxu0 %v71
  %239 = vmatpush.msra.mxu0 %v67
  %240 = vmatpush.msra.mxu0 %v63
  %241 = vmatpush.msra.mxu0 %v59
  %242 = vmatpush.msra.mxu0 %v55
  %243 = vmatpush.msra.mxu0 %v51
  %244 = vmatpush.msra.mxu0 %v47
  %245 = vmatpush.msra.mxu0 %v43
  %246 = vmatmul.f32.gmra.mxu0 %v84
  %v247 = vpop.f32.mrf.mxu0
  %v248 = vadd.f32 %v77, %v247
  %249 = vmatmul.f32.gmra.mxu0 %v87
  %v250 = vpop.f32.mrf.mxu0
  %v251 = vadd.f32 %v77, %v250
  %252 = vmatmul.f32.gmra.mxu0 %v90
  %v253 = vpop.f32.mrf.mxu0
  %v254 = vadd.f32 %v77, %v253
  %255 = vmatmul.f32.gmra.mxu0 %v93
  %v256 = vpop.f32.mrf.mxu0
  %v257 = vadd.f32 %v77, %v256
  %258 = vmatmul.f32.gmra.mxu0 %v96
  %v259 = vpop.f32.mrf.mxu0
  %v260 = vadd.f32 %v77, %v259
  %261 = vmatmul.f32.gmra.mxu0 %v99
  %v262 = vpop.f32.mrf.mxu0
  %v263 = vadd.f32 %v77, %v262
  %264 = vmatmul.f32.gmra.mxu0 %v102
  %v265 = vpop.f32.mrf.mxu0
  %v266 = vadd.f32 %v77, %v265
  %267 = vmatmul.f32.gmra.mxu0 %v105
  %v268 = vpop.f32.mrf.mxu0
  %v269 = vadd.f32 %v77, %v268
  %270 = vdwg.mxu0
  %271 = vst [vmem:[#allocation2] sm:$0xff] %v125
  %272 = vst [vmem:[#allocation2 + $0x8] sm:$0xff] %v166
  %273 = vst [vmem:[#allocation2 + $0x10] sm:$0xff] %v207
  %274 = vst [vmem:[#allocation2 + $0x18] sm:$0xff] %v248
  %275 = vst [vmem:[#allocation2 + $0x20] sm:$0xff] %v128
  %276 = vst [vmem:[#allocation2 + $0x28] sm:$0xff] %v169
  %277 = vst [vmem:[#allocation2 + $0x30] sm:$0xff] %v210
  %278 = vst [vmem:[#allocation2 + $0x38] sm:$0xff] %v251
  %279 = vst [vmem:[#allocation2 + $0x40] sm:$0xff] %v131
  %280 = vst [vmem:[#allocation2 + $0x48] sm:$0xff] %v172
  %281 = vst [vmem:[#allocation2 + $0x50] sm:$0xff] %v213
  %282 = vst [vmem:[#allocation2 + $0x58] sm:$0xff] %v254
  %283 = vst [vmem:[#allocation2 + $0x60] sm:$0xff] %v134
  %284 = vst [vmem:[#allocation2 + $0x68] sm:$0xff] %v175
  %285 = vst [vmem:[#allocation2 + $0x70] sm:$0xff] %v216
  %286 = vst [vmem:[#allocation2 + $0x78] sm:$0xff] %v257
  %287 = vst [vmem:[#allocation2 + $0x80] sm:$0xff] %v137
  %288 = vst [vmem:[#allocation2 + $0x88] sm:$0xff] %v178
  %289 = vst [vmem:[#allocation2 + $0x90] sm:$0xff] %v219
  %290 = vst [vmem:[#allocation2 + $0x98] sm:$0xff] %v260
  %291 = vst [vmem:[#allocation2 + $0xa0] sm:$0xff] %v140
  %292 = vst [vmem:[#allocation2 + $0xa8] sm:$0xff] %v181
  %293 = vst [vmem:[#allocation2 + $0xb0] sm:$0xff] %v222
  %294 = vst [vmem:[#allocation2 + $0xb8] sm:$0xff] %v263
  %295 = vst [vmem:[#allocation2 + $0xc0] sm:$0xff] %v143
  %296 = vst [vmem:[#allocation2 + $0xc8] sm:$0xff] %v184
  %297 = vst [vmem:[#allocation2 + $0xd0] sm:$0xff] %v225
  %298 = vst [vmem:[#allocation2 + $0xd8] sm:$0xff] %v266
  %299 = vst [vmem:[#allocation2 + $0xe0] sm:$0xff] %v146
  %300 = vst [vmem:[#allocation2 + $0xe8] sm:$0xff] %v187
  %301 = vst [vmem:[#allocation2 + $0xf0] sm:$0xff] %v228
  %302 = vst [vmem:[#allocation2 + $0xf8] sm:$0xff] %v269
  %v303 = vld [vmem:[%s2] sm:$0xff]
  %v304 = vld [vmem:[%s2 + $0x8] sm:$0xff]
  %v305 = vld [vmem:[%s2 + $0x10] sm:$0xff]
  %v306 = vld [vmem:[%s2 + $0x18] sm:$0xff]
  %v307 = vld [vmem:[%s2 + $0x20] sm:$0xff]
  %v308 = vld [vmem:[%s2 + $0x28] sm:$0xff]
  %v309 = vld [vmem:[%s2 + $0x30] sm:$0xff]
  %v310 = vld [vmem:[%s2 + $0x38] sm:$0xff]
  %v311 = vld [vmem:[%s2 + $0x40] sm:$0xff]
  %v312 = vld [vmem:[%s2 + $0x48] sm:$0xff]
  %v313 = vld [vmem:[%s2 + $0x50] sm:$0xff]
  %v314 = vld [vmem:[%s2 + $0x58] sm:$0xff]
  %v315 = vld [vmem:[%s2 + $0x60] sm:$0xff]
  %v316 = vld [vmem:[%s2 + $0x68] sm:$0xff]
  %v317 = vld [vmem:[%s2 + $0x70] sm:$0xff]
  %v318 = vld [vmem:[%s2 + $0x78] sm:$0xff]
  %v319 = vld [vmem:[%s2 + $0x80] sm:$0xff]
  %v320 = vld [vmem:[%s2 + $0x88] sm:$0xff]
  %v321 = vld [vmem:[%s2 + $0x90] sm:$0xff]
  %v322 = vld [vmem:[%s2 + $0x98] sm:$0xff]
  %v323 = vld [vmem:[%s2 + $0xa0] sm:$0xff]
  %v324 = vld [vmem:[%s2 + $0xa8] sm:$0xff]
  %v325 = vld [vmem:[%s2 + $0xb0] sm:$0xff]
  %v326 = vld [vmem:[%s2 + $0xb8] sm:$0xff]
  %v327 = vld [vmem:[%s2 + $0xc0] sm:$0xff]
  %v328 = vld [vmem:[%s2 + $0xc8] sm:$0xff]
  %v329 = vld [vmem:[%s2 + $0xd0] sm:$0xff]
  %v330 = vld [vmem:[%s2 + $0xd8] sm:$0xff]
  %v331 = vld [vmem:[%s2 + $0xe0] sm:$0xff]
  %v332 = vld [vmem:[%s2 + $0xe8] sm:$0xff]
  %v333 = vld [vmem:[%s2 + $0xf0] sm:$0xff]
  %v334 = vld [vmem:[%s2 + $0xf8] sm:$0xff]
  %v335 = vld [vmem:[%s2 + $0x100] sm:$0xff]
  %v336 = vld [vmem:[%s2 + $0x108] sm:$0xff]
  %v337 = vld [vmem:[%s2 + $0x110] sm:$0xff]
  %v338 = vld [vmem:[%s2 + $0x118] sm:$0xff]
  %v339 = vld [vmem:[%s2 + $0x120] sm:$0xff]
  %v340 = vld [vmem:[%s2 + $0x128] sm:$0xff]
  %v341 = vld [vmem:[%s2 + $0x130] sm:$0xff]
  %v342 = vld [vmem:[%s2 + $0x138] sm:$0xff]
  %v343 = vld [vmem:[%s2 + $0x140] sm:$0xff]
  %v344 = vld [vmem:[%s2 + $0x148] sm:$0xff]
  %v345 = vld [vmem:[%s2 + $0x150] sm:$0xff]
  %v346 = vld [vmem:[%s2 + $0x158] sm:$0xff]
  %v347 = vld [vmem:[%s2 + $0x160] sm:$0xff]
  %v348 = vld [vmem:[%s2 + $0x168] sm:$0xff]
  %v349 = vld [vmem:[%s2 + $0x170] sm:$0xff]
  %v350 = vld [vmem:[%s2 + $0x178] sm:$0xff]
  %v351 = vld [vmem:[%s2 + $0x180] sm:$0xff]
  %v352 = vld [vmem:[%s2 + $0x188] sm:$0xff]
  %v353 = vld [vmem:[%s2 + $0x190] sm:$0xff]
  %v354 = vld [vmem:[%s2 + $0x198] sm:$0xff]
  %v355 = vld [vmem:[%s2 + $0x1a0] sm:$0xff]
  %v356 = vld [vmem:[%s2 + $0x1a8] sm:$0xff]
  %v357 = vld [vmem:[%s2 + $0x1b0] sm:$0xff]
  %v358 = vld [vmem:[%s2 + $0x1b8] sm:$0xff]
  %v359 = vld [vmem:[%s2 + $0x1c0] sm:$0xff]
  %v360 = vld [vmem:[%s2 + $0x1c8] sm:$0xff]
  %v361 = vld [vmem:[%s2 + $0x1d0] sm:$0xff]
  %v362 = vld [vmem:[%s2 + $0x1d8] sm:$0xff]
  %v363 = vld [vmem:[%s2 + $0x1e0] sm:$0xff]
  %v364 = vld [vmem:[%s2 + $0x1e8] sm:$0xff]
  %v365 = vld [vmem:[%s2 + $0x1f0] sm:$0xff]
  %v366 = vld [vmem:[%s2 + $0x1f8] sm:$0xff]
  %v367 = vld [vmem:[#allocation2] sm:$0xff]
  %v368 = vld [vmem:[#allocation2 + $0x8] sm:$0xff]
  %v369 = vld [vmem:[#allocation2 + $0x10] sm:$0xff]
  %v370 = vld [vmem:[#allocation2 + $0x18] sm:$0xff]
  %371 = vmatpush.msra.mxu0 %v363
  %372 = vmatpush.msra.mxu0 %v359
  %373 = vmatpush.msra.mxu0 %v355
  %374 = vmatpush.msra.mxu0 %v351
  %375 = vmatpush.msra.mxu0 %v347
  %376 = vmatpush.msra.mxu0 %v343
  %377 = vmatpush.msra.mxu0 %v339
  %378 = vmatpush.msra.mxu0 %v335
  %379 = vmatpush.msra.mxu0 %v331
  %380 = vmatpush.msra.mxu0 %v327
  %381 = vmatpush.msra.mxu0 %v323
  %382 = vmatpush.msra.mxu0 %v319
  %383 = vmatpush.msra.mxu0 %v315
  %384 = vmatpush.msra.mxu0 %v311
  %385 = vmatpush.msra.mxu0 %v307
  %386 = vmatpush.msra.mxu0 %v303
  %387 = vmatmul.f32.gmra.mxu0 0.0
  %v388 = vpop.f32.mrf.mxu0
  %v389 = vadd.f32 0.0, %v388
  %390 = vdwg.mxu0
  %391 = vmatpush.msra.mxu0 %v364
  %392 = vmatpush.msra.mxu0 %v360
  %393 = vmatpush.msra.mxu0 %v356
  %394 = vmatpush.msra.mxu0 %v352
  %395 = vmatpush.msra.mxu0 %v348
  %396 = vmatpush.msra.mxu0 %v344
  %397 = vmatpush.msra.mxu0 %v340
  %398 = vmatpush.msra.mxu0 %v336
  %399 = vmatpush.msra.mxu0 %v332
  %400 = vmatpush.msra.mxu0 %v328
  %401 = vmatpush.msra.mxu0 %v324
  %402 = vmatpush.msra.mxu0 %v320
  %403 = vmatpush.msra.mxu0 %v316
  %404 = vmatpush.msra.mxu0 %v312
  %405 = vmatpush.msra.mxu0 %v308
  %406 = vmatpush.msra.mxu0 %v304
  %407 = vmatmul.f32.gmra.mxu0 0.0
  %v408 = vpop.f32.mrf.mxu0
  %v409 = vadd.f32 0.0, %v408
  %410 = vdwg.mxu0
  %411 = vmatpush.msra.mxu0 %v365
  %412 = vmatpush.msra.mxu0 %v361
  %413 = vmatpush.msra.mxu0 %v357
  %414 = vmatpush.msra.mxu0 %v353
  %415 = vmatpush.msra.mxu0 %v349
  %416 = vmatpush.msra.mxu0 %v345
  %417 = vmatpush.msra.mxu0 %v341
  %418 = vmatpush.msra.mxu0 %v337
  %419 = vmatpush.msra.mxu0 %v333
  %420 = vmatpush.msra.mxu0 %v329
  %421 = vmatpush.msra.mxu0 %v325
  %422 = vmatpush.msra.mxu0 %v321
  %423 = vmatpush.msra.mxu0 %v317
  %424 = vmatpush.msra.mxu0 %v313
  %425 = vmatpush.msra.mxu0 %v309
  %426 = vmatpush.msra.mxu0 %v305
  %427 = vmatmul.f32.gmra.mxu0 0.0
  %v428 = vpop.f32.mrf.mxu0
  %v429 = vadd.f32 0.0, %v428
  %430 = vdwg.mxu0
  %431 = vmatpush.msra.mxu0 %v366
  %432 = vmatpush.msra.mxu0 %v362
  %433 = vmatpush.msra.mxu0 %v358
  %434 = vmatpush.msra.mxu0 %v354
  %435 = vmatpush.msra.mxu0 %v350
  %436 = vmatpush.msra.mxu0 %v346
  %437 = vmatpush.msra.mxu0 %v342
  %438 = vmatpush.msra.mxu0 %v338
  %439 = vmatpush.msra.mxu0 %v334
  %440 = vmatpush.msra.mxu0 %v330
  %441 = vmatpush.msra.mxu0 %v326
  %442 = vmatpush.msra.mxu0 %v322
  %443 = vmatpush.msra.mxu0 %v318
  %444 = vmatpush.msra.mxu0 %v314
  %445 = vmatpush.msra.mxu0 %v310
  %446 = vmatpush.msra.mxu0 %v306
  %447 = vmatmul.f32.gmra.mxu0 0.0
  %v448 = vpop.f32.mrf.mxu0
  %v449 = vadd.f32 0.0, %v448
  %450 = vdwg.mxu0
  %v451 = vadd.f32 %v367, %v389
  %v452 = vadd.f32 %v368, %v409
  %v453 = vadd.f32 %v369, %v429
  %v454 = vadd.f32 %v370, %v449
  %v455 = vsub.f32 0.0, %v451
  %v456 = vmul.f32 %v455, 1.442695
  %v457 = vpow.pop %v456
  %v458 = vadd.f32 %v457, 1.0
  %v459 = vrcp.pop %v458
  %v460 = vmul.f32 %v458, %v459
  %v461 = vsub.f32 1.0, %v460
  %v462 = vmul.f32 %v459, %v461
  %v463 = vadd.f32 %v459, %v462
  %vm464 = vweird.f32 %v458
  %vm465 = vweird.f32 %v459
  %vm466 = vmor %vm464, %vm465
  %v467 = vsel %vm466, %v459, %v463
  %v468 = vand.u32 2147483647, %v458
  %vm469 = vcmp.eq.f32.partialorder %v468, 8.507059e+37
  %v470 = vand.u32 %v458, 2147483648
  %v471 = vor.u32 1.1754944e-38, %v470
  %v472 = vsel %vm469, %v471, %v467
  %v473 = vmul.f32 1.0, %v472
  %v474 = vsub.f32 0.0, %v452
  %v475 = vmul.f32 %v474, 1.442695
  %v476 = vpow.pop %v475
  %v477 = vadd.f32 %v476, 1.0
  %v478 = vrcp.pop %v477
  %v479 = vmul.f32 %v477, %v478
  %v480 = vsub.f32 1.0, %v479
  %v481 = vmul.f32 %v478, %v480
  %v482 = vadd.f32 %v478, %v481
  %vm483 = vweird.f32 %v477
  %vm484 = vweird.f32 %v478
  %vm485 = vmor %vm483, %vm484
  %v486 = vsel %vm485, %v478, %v482
  %v487 = vand.u32 2147483647, %v477
  %vm488 = vcmp.eq.f32.partialorder %v487, 8.507059e+37
  %v489 = vand.u32 %v477, 2147483648
  %v490 = vor.u32 1.1754944e-38, %v489
  %v491 = vsel %vm488, %v490, %v486
  %v492 = vmul.f32 1.0, %v491
  %v493 = vsub.f32 0.0, %v453
  %v494 = vmul.f32 %v493, 1.442695
  %v495 = vpow.pop %v494
  %v496 = vadd.f32 %v495, 1.0
  %v497 = vrcp.pop %v496
  %v498 = vmul.f32 %v496, %v497
  %v499 = vsub.f32 1.0, %v498
  %v500 = vmul.f32 %v497, %v499
  %v501 = vadd.f32 %v497, %v500
  %vm502 = vweird.f32 %v496
  %vm503 = vweird.f32 %v497
  %vm504 = vmor %vm502, %vm503
  %v505 = vsel %vm504, %v497, %v501
  %v506 = vand.u32 2147483647, %v496
  %vm507 = vcmp.eq.f32.partialorder %v506, 8.507059e+37
  %v508 = vand.u32 %v496, 2147483648
  %v509 = vor.u32 1.1754944e-38, %v508
  %v510 = vsel %vm507, %v509, %v505
  %v511 = vmul.f32 1.0, %v510
  %v512 = vtanh.pop %v454
  %v513 = vmul.f32 %v492, 0.0
  %v514 = vmul.f32 %v473, %v512
  %v515 = vadd.f32 %v513, %v514
  %v516 = vtanh.pop %v515
  %v517 = vmul.f32 %v511, %v516
  %v518 = vadd.f32 %v517, 0.0
  %v519 = vld [vmem:[#allocation2 + $0x20] sm:$0xff]
  %v520 = vld [vmem:[#allocation2 + $0x28] sm:$0xff]
  %v521 = vld [vmem:[#allocation2 + $0x30] sm:$0xff]
  %v522 = vld [vmem:[#allocation2 + $0x38] sm:$0xff]
  %523 = vmatpush.msra.mxu0 %v363
  %524 = vmatpush.msra.mxu0 %v359
  %525 = vmatpush.msra.mxu0 %v355
  %526 = vmatpush.msra.mxu0 %v351
  %527 = vmatpush.msra.mxu0 %v347
  %528 = vmatpush.msra.mxu0 %v343
  %529 = vmatpush.msra.mxu0 %v339
  %530 = vmatpush.msra.mxu0 %v335
  %531 = vmatpush.msra.mxu0 %v331
  %532 = vmatpush.msra.mxu0 %v327
  %533 = vmatpush.msra.mxu0 %v323
  %534 = vmatpush.msra.mxu0 %v319
  %535 = vmatpush.msra.mxu0 %v315
  %536 = vmatpush.msra.mxu0 %v311
  %537 = vmatpush.msra.mxu0 %v307
  %538 = vmatpush.msra.mxu0 %v303
  %539 = vmatmul.f32.gmra.mxu0 %v517
  %v540 = vpop.f32.mrf.mxu0
  %v541 = vadd.f32 0.0, %v540
  %542 = vdwg.mxu0
  %543 = vmatpush.msra.mxu0 %v364
  %544 = vmatpush.msra.mxu0 %v360
  %545 = vmatpush.msra.mxu0 %v356
  %546 = vmatpush.msra.mxu0 %v352
  %547 = vmatpush.msra.mxu0 %v348
  %548 = vmatpush.msra.mxu0 %v344
  %549 = vmatpush.msra.mxu0 %v340
  %550 = vmatpush.msra.mxu0 %v336
  %551 = vmatpush.msra.mxu0 %v332
  %552 = vmatpush.msra.mxu0 %v328
  %553 = vmatpush.msra.mxu0 %v324
  %554 = vmatpush.msra.mxu0 %v320
  %555 = vmatpush.msra.mxu0 %v316
  %556 = vmatpush.msra.mxu0 %v312
  %557 = vmatpush.msra.mxu0 %v308
  %558 = vmatpush.msra.mxu0 %v304
  %559 = vmatmul.f32.gmra.mxu0 %v517
  %v560 = vpop.f32.mrf.mxu0
  %v561 = vadd.f32 0.0, %v560
  %562 = vdwg.mxu0
  %563 = vmatpush.msra.mxu0 %v365
  %564 = vmatpush.msra.mxu0 %v361
  %565 = vmatpush.msra.mxu0 %v357
  %566 = vmatpush.msra.mxu0 %v353
  %567 = vmatpush.msra.mxu0 %v349
  %568 = vmatpush.msra.mxu0 %v345
  %569 = vmatpush.msra.mxu0 %v341
  %570 = vmatpush.msra.mxu0 %v337
  %571 = vmatpush.msra.mxu0 %v333
  %572 = vmatpush.msra.mxu0 %v329
  %573 = vmatpush.msra.mxu0 %v325
  %574 = vmatpush.msra.mxu0 %v321
  %575 = vmatpush.msra.mxu0 %v317
  %576 = vmatpush.msra.mxu0 %v313
  %577 = vmatpush.msra.mxu0 %v309
  %578 = vmatpush.msra.mxu0 %v305
  %579 = vmatmul.f32.gmra.mxu0 %v517
  %v580 = vpop.f32.mrf.mxu0
  %v581 = vadd.f32 0.0, %v580
  %582 = vdwg.mxu0
  %583 = vmatpush.msra.mxu0 %v366
  %584 = vmatpush.msra.mxu0 %v362
  %585 = vmatpush.msra.mxu0 %v358
  %586 = vmatpush.msra.mxu0 %v354
  %587 = vmatpush.msra.mxu0 %v350
  %588 = vmatpush.msra.mxu0 %v346
  %589 = vmatpush.msra.mxu0 %v342
  %590 = vmatpush.msra.mxu0 %v338
  %591 = vmatpush.msra.mxu0 %v334
  %592 = vmatpush.msra.mxu0 %v330
  %593 = vmatpush.msra.mxu0 %v326
  %594 = vmatpush.msra.mxu0 %v322
  %595 = vmatpush.msra.mxu0 %v318
  %596 = vmatpush.msra.mxu0 %v314
  %597 = vmatpush.msra.mxu0 %v310
  %598 = vmatpush.msra.mxu0 %v306
  %599 = vmatmul.f32.gmra.mxu0 %v517
  %v600 = vpop.f32.mrf.mxu0
  %v601 = vadd.f32 0.0, %v600
  %602 = vdwg.mxu0
  %v603 = vadd.f32 %v519, %v541
  %v604 = vadd.f32 %v520, %v561
  %v605 = vadd.f32 %v521, %v581
  %v606 = vadd.f32 %v522, %v601
  %v607 = vsub.f32 0.0, %v603
  %v608 = vmul.f32 %v607, 1.442695
  %v609 = vpow.pop %v608
  %v610 = vadd.f32 %v609, 1.0
  %v611 = vrcp.pop %v610
  %v612 = vmul.f32 %v610, %v611
  %v613 = vsub.f32 1.0, %v612
  %v614 = vmul.f32 %v611, %v613
  %v615 = vadd.f32 %v611, %v614
  %vm616 = vweird.f32 %v610
  %vm617 = vweird.f32 %v611
  %vm618 = vmor %vm616, %vm617
  %v619 = vsel %vm618, %v611, %v615
  %v620 = vand.u32 2147483647, %v610
  %vm621 = vcmp.eq.f32.partialorder %v620, 8.507059e+37
  %v622 = vand.u32 %v610, 2147483648
  %v623 = vor.u32 1.1754944e-38, %v622
  %v624 = vsel %vm621, %v623, %v619
  %v625 = vmul.f32 1.0, %v624
  %v626 = vsub.f32 0.0, %v604
  %v627 = vmul.f32 %v626, 1.442695
  %v628 = vpow.pop %v627
  %v629 = vadd.f32 %v628, 1.0
  %v630 = vrcp.pop %v629
  %v631 = vmul.f32 %v629, %v630
  %v632 = vsub.f32 1.0, %v631
  %v633 = vmul.f32 %v630, %v632
  %v634 = vadd.f32 %v630, %v633
  %vm635 = vweird.f32 %v629
  %vm636 = vweird.f32 %v630
  %vm637 = vmor %vm635, %vm636
  %v638 = vsel %vm637, %v630, %v634
  %v639 = vand.u32 2147483647, %v629
  %vm640 = vcmp.eq.f32.partialorder %v639, 8.507059e+37
  %v641 = vand.u32 %v629, 2147483648
  %v642 = vor.u32 1.1754944e-38, %v641
  %v643 = vsel %vm640, %v642, %v638
  %v644 = vmul.f32 1.0, %v643
  %v645 = vsub.f32 0.0, %v605
  %v646 = vmul.f32 %v645, 1.442695
  %v647 = vpow.pop %v646
  %v648 = vadd.f32 %v647, 1.0
  %v649 = vrcp.pop %v648
  %v650 = vmul.f32 %v648, %v649
  %v651 = vsub.f32 1.0, %v650
  %v652 = vmul.f32 %v649, %v651
  %v653 = vadd.f32 %v649, %v652
  %vm654 = vweird.f32 %v648
  %vm655 = vweird.f32 %v649
  %vm656 = vmor %vm654, %vm655
  %v657 = vsel %vm656, %v649, %v653
  %v658 = vand.u32 2147483647, %v648
  %vm659 = vcmp.eq.f32.partialorder %v658, 8.507059e+37
  %v660 = vand.u32 %v648, 2147483648
  %v661 = vor.u32 1.1754944e-38, %v660
  %v662 = vsel %vm659, %v661, %v657
  %v663 = vmul.f32 1.0, %v662
  %v664 = vtanh.pop %v606
  %v665 = vmul.f32 %v644, %v515
  %v666 = vmul.f32 %v625, %v664
  %v667 = vadd.f32 %v665, %v666
  %v668 = vtanh.pop %v667
  %v669 = vmul.f32 %v663, %v668
  %v670 = vadd.f32 %v518, %v669
  %v671 = vmax.f32 %v517, %v669
  %v672 = vld [vmem:[#allocation2 + $0x40] sm:$0xff]
  %v673 = vld [vmem:[#allocation2 + $0x48] sm:$0xff]
  %v674 = vld [vmem:[#allocation2 + $0x50] sm:$0xff]
  %v675 = vld [vmem:[#allocation2 + $0x58] sm:$0xff]
  %676 = vmatpush.msra.mxu0 %v363
  %677 = vmatpush.msra.mxu0 %v359
  %678 = vmatpush.msra.mxu0 %v355
  %679 = vmatpush.msra.mxu0 %v351
  %680 = vmatpush.msra.mxu0 %v347
  %681 = vmatpush.msra.mxu0 %v343
  %682 = vmatpush.msra.mxu0 %v339
  %683 = vmatpush.msra.mxu0 %v335
  %684 = vmatpush.msra.mxu0 %v331
  %685 = vmatpush.msra.mxu0 %v327
  %686 = vmatpush.msra.mxu0 %v323
  %687 = vmatpush.msra.mxu0 %v319
  %688 = vmatpush.msra.mxu0 %v315
  %689 = vmatpush.msra.mxu0 %v311
  %690 = vmatpush.msra.mxu0 %v307
  %691 = vmatpush.msra.mxu0 %v303
  %692 = vmatmul.f32.gmra.mxu0 %v669
  %v693 = vpop.f32.mrf.mxu0
  %v694 = vadd.f32 0.0, %v693
  %695 = vdwg.mxu0
  %696 = vmatpush.msra.mxu0 %v364
  %697 = vmatpush.msra.mxu0 %v360
  %698 = vmatpush.msra.mxu0 %v356
  %699 = vmatpush.msra.mxu0 %v352
  %700 = vmatpush.msra.mxu0 %v348
  %701 = vmatpush.msra.mxu0 %v344
  %702 = vmatpush.msra.mxu0 %v340
  %703 = vmatpush.msra.mxu0 %v336
  %704 = vmatpush.msra.mxu0 %v332
  %705 = vmatpush.msra.mxu0 %v328
  %706 = vmatpush.msra.mxu0 %v324
  %707 = vmatpush.msra.mxu0 %v320
  %708 = vmatpush.msra.mxu0 %v316
  %709 = vmatpush.msra.mxu0 %v312
  %710 = vmatpush.msra.mxu0 %v308
  %711 = vmatpush.msra.mxu0 %v304
  %712 = vmatmul.f32.gmra.mxu0 %v669
  %v713 = vpop.f32.mrf.mxu0
  %v714 = vadd.f32 0.0, %v713
  %715 = vdwg.mxu0
  %716 = vmatpush.msra.mxu0 %v365
  %717 = vmatpush.msra.mxu0 %v361
  %718 = vmatpush.msra.mxu0 %v357
  %719 = vmatpush.msra.mxu0 %v353
  %720 = vmatpush.msra.mxu0 %v349
  %721 = vmatpush.msra.mxu0 %v345
  %722 = vmatpush.msra.mxu0 %v341
  %723 = vmatpush.msra.mxu0 %v337
  %724 = vmatpush.msra.mxu0 %v333
  %725 = vmatpush.msra.mxu0 %v329
  %726 = vmatpush.msra.mxu0 %v325
  %727 = vmatpush.msra.mxu0 %v321
  %728 = vmatpush.msra.mxu0 %v317
  %729 = vmatpush.msra.mxu0 %v313
  %730 = vmatpush.msra.mxu0 %v309
  %731 = vmatpush.msra.mxu0 %v305
  %732 = vmatmul.f32.gmra.mxu0 %v669
  %v733 = vpop.f32.mrf.mxu0
  %v734 = vadd.f32 0.0, %v733
  %735 = vdwg.mxu0
  %736 = vmatpush.msra.mxu0 %v366
  %737 = vmatpush.msra.mxu0 %v362
  %738 = vmatpush.msra.mxu0 %v358
  %739 = vmatpush.msra.mxu0 %v354
  %740 = vmatpush.msra.mxu0 %v350
  %741 = vmatpush.msra.mxu0 %v346
  %742 = vmatpush.msra.mxu0 %v342
  %743 = vmatpush.msra.mxu0 %v338
  %744 = vmatpush.msra.mxu0 %v334
  %745 = vmatpush.msra.mxu0 %v330
  %746 = vmatpush.msra.mxu0 %v326
  %747 = vmatpush.msra.mxu0 %v322
  %748 = vmatpush.msra.mxu0 %v318
  %749 = vmatpush.msra.mxu0 %v314
  %750 = vmatpush.msra.mxu0 %v310
  %751 = vmatpush.msra.mxu0 %v306
  %752 = vmatmul.f32.gmra.mxu0 %v669
  %v753 = vpop.f32.mrf.mxu0
  %v754 = vadd.f32 0.0, %v753
  %755 = vdwg.mxu0
  %v756 = vadd.f32 %v672, %v694
  %v757 = vadd.f32 %v673, %v714
  %v758 = vadd.f32 %v674, %v734
  %v759 = vadd.f32 %v675, %v754
  %v760 = vsub.f32 0.0, %v756
  %v761 = vmul.f32 %v760, 1.442695
  %v762 = vpow.pop %v761
  %v763 = vadd.f32 %v762, 1.0
  %v764 = vrcp.pop %v763
  %v765 = vmul.f32 %v763, %v764
  %v766 = vsub.f32 1.0, %v765
  %v767 = vmul.f32 %v764, %v766
  %v768 = vadd.f32 %v764, %v767
  %vm769 = vweird.f32 %v763
  %vm770 = vweird.f32 %v764
  %vm771 = vmor %vm769, %vm770
  %v772 = vsel %vm771, %v764, %v768
  %v773 = vand.u32 2147483647, %v763
  %vm774 = vcmp.eq.f32.partialorder %v773, 8.507059e+37
  %v775 = vand.u32 %v763, 2147483648
  %v776 = vor.u32 1.1754944e-38, %v775
  %v777 = vsel %vm774, %v776, %v772
  %v778 = vmul.f32 1.0, %v777
  %v779 = vsub.f32 0.0, %v757
  %v780 = vmul.f32 %v779, 1.442695
  %v781 = vpow.pop %v780
  %v782 = vadd.f32 %v781, 1.0
  %v783 = vrcp.pop %v782
  %v784 = vmul.f32 %v782, %v783
  %v785 = vsub.f32 1.0, %v784
  %v786 = vmul.f32 %v783, %v785
  %v787 = vadd.f32 %v783, %v786
  %vm788 = vweird.f32 %v782
  %vm789 = vweird.f32 %v783
  %vm790 = vmor %vm788, %vm789
  %v791 = vsel %vm790, %v783, %v787
  %v792 = vand.u32 2147483647, %v782
  %vm793 = vcmp.eq.f32.partialorder %v792, 8.507059e+37
  %v794 = vand.u32 %v782, 2147483648
  %v795 = vor.u32 1.1754944e-38, %v794
  %v796 = vsel %vm793, %v795, %v791
  %v797 = vmul.f32 1.0, %v796
  %v798 = vsub.f32 0.0, %v758
  %v799 = vmul.f32 %v798, 1.442695
  %v800 = vpow.pop %v799
  %v801 = vadd.f32 %v800, 1.0
  %v802 = vrcp.pop %v801
  %v803 = vmul.f32 %v801, %v802
  %v804 = vsub.f32 1.0, %v803
  %v805 = vmul.f32 %v802, %v804
  %v806 = vadd.f32 %v802, %v805
  %vm807 = vweird.f32 %v801
  %vm808 = vweird.f32 %v802
  %vm809 = vmor %vm807, %vm808
  %v810 = vsel %vm809, %v802, %v806
  %v811 = vand.u32 2147483647, %v801
  %vm812 = vcmp.eq.f32.partialorder %v811, 8.507059e+37
  %v813 = vand.u32 %v801, 2147483648
  %v814 = vor.u32 1.1754944e-38, %v813
  %v815 = vsel %vm812, %v814, %v810
  %v816 = vmul.f32 1.0, %v815
  %v817 = vtanh.pop %v759
  %v818 = vmul.f32 %v797, %v667
  %v819 = vmul.f32 %v778, %v817
  %v820 = vadd.f32 %v818, %v819
  %v821 = vtanh.pop %v820
  %v822 = vmul.f32 %v816, %v821
  %v823 = vadd.f32 %v670, %v822
  %v824 = vmax.f32 %v671, %v822
  %v825 = vld [vmem:[#allocation2 + $0x60] sm:$0xff]
  %v826 = vld [vmem:[#allocation2 + $0x68] sm:$0xff]
  %v827 = vld [vmem:[#allocation2 + $0x70] sm:$0xff]
  %v828 = vld [vmem:[#allocation2 + $0x78] sm:$0xff]
  %829 = vmatpush.msra.mxu0 %v363
  %830 = vmatpush.msra.mxu0 %v359
  %831 = vmatpush.msra.mxu0 %v355
  %832 = vmatpush.msra.mxu0 %v351
  %833 = vmatpush.msra.mxu0 %v347
  %834 = vmatpush.msra.mxu0 %v343
  %835 = vmatpush.msra.mxu0 %v339
  %836 = vmatpush.msra.mxu0 %v335
  %837 = vmatpush.msra.mxu0 %v331
  %838 = vmatpush.msra.mxu0 %v327
  %839 = vmatpush.msra.mxu0 %v323
  %840 = vmatpush.msra.mxu0 %v319
  %841 = vmatpush.msra.mxu0 %v315
  %842 = vmatpush.msra.mxu0 %v311
  %843 = vmatpush.msra.mxu0 %v307
  %844 = vmatpush.msra.mxu0 %v303
  %845 = vmatmul.f32.gmra.mxu0 %v822
  %v846 = vpop.f32.mrf.mxu0
  %v847 = vadd.f32 0.0, %v846
  %848 = vdwg.mxu0
  %849 = vmatpush.msra.mxu0 %v364
  %850 = vmatpush.msra.mxu0 %v360
  %851 = vmatpush.msra.mxu0 %v356
  %852 = vmatpush.msra.mxu0 %v352
  %853 = vmatpush.msra.mxu0 %v348
  %854 = vmatpush.msra.mxu0 %v344
  %855 = vmatpush.msra.mxu0 %v340
  %856 = vmatpush.msra.mxu0 %v336
  %857 = vmatpush.msra.mxu0 %v332
  %858 = vmatpush.msra.mxu0 %v328
  %859 = vmatpush.msra.mxu0 %v324
  %860 = vmatpush.msra.mxu0 %v320
  %861 = vmatpush.msra.mxu0 %v316
  %862 = vmatpush.msra.mxu0 %v312
  %863 = vmatpush.msra.mxu0 %v308
  %864 = vmatpush.msra.mxu0 %v304
  %865 = vmatmul.f32.gmra.mxu0 %v822
  %v866 = vpop.f32.mrf.mxu0
  %v867 = vadd.f32 0.0, %v866
  %868 = vdwg.mxu0
  %869 = vmatpush.msra.mxu0 %v365
  %870 = vmatpush.msra.mxu0 %v361
  %871 = vmatpush.msra.mxu0 %v357
  %872 = vmatpush.msra.mxu0 %v353
  %873 = vmatpush.msra.mxu0 %v349
  %874 = vmatpush.msra.mxu0 %v345
  %875 = vmatpush.msra.mxu0 %v341
  %876 = vmatpush.msra.mxu0 %v337
  %877 = vmatpush.msra.mxu0 %v333
  %878 = vmatpush.msra.mxu0 %v329
  %879 = vmatpush.msra.mxu0 %v325
  %880 = vmatpush.msra.mxu0 %v321
  %881 = vmatpush.msra.mxu0 %v317
  %882 = vmatpush.msra.mxu0 %v313
  %883 = vmatpush.msra.mxu0 %v309
  %884 = vmatpush.msra.mxu0 %v305
  %885 = vmatmul.f32.gmra.mxu0 %v822
  %v886 = vpop.f32.mrf.mxu0
  %v887 = vadd.f32 0.0, %v886
  %888 = vdwg.mxu0
  %889 = vmatpush.msra.mxu0 %v366
  %890 = vmatpush.msra.mxu0 %v362
  %891 = vmatpush.msra.mxu0 %v358
  %892 = vmatpush.msra.mxu0 %v354
  %893 = vmatpush.msra.mxu0 %v350
  %894 = vmatpush.msra.mxu0 %v346
  %895 = vmatpush.msra.mxu0 %v342
  %896 = vmatpush.msra.mxu0 %v338
  %897 = vmatpush.msra.mxu0 %v334
  %898 = vmatpush.msra.mxu0 %v330
  %899 = vmatpush.msra.mxu0 %v326
  %900 = vmatpush.msra.mxu0 %v322
  %901 = vmatpush.msra.mxu0 %v318
  %902 = vmatpush.msra.mxu0 %v314
  %903 = vmatpush.msra.mxu0 %v310
  %904 = vmatpush.msra.mxu0 %v306
  %905 = vmatmul.f32.gmra.mxu0 %v822
  %v906 = vpop.f32.mrf.mxu0
  %v907 = vadd.f32 0.0, %v906
  %908 = vdwg.mxu0
  %v909 = vadd.f32 %v825, %v847
  %v910 = vadd.f32 %v826, %v867
  %v911 = vadd.f32 %v827, %v887
  %v912 = vadd.f32 %v828, %v907
  %v913 = vsub.f32 0.0, %v909
  %v914 = vmul.f32 %v913, 1.442695
  %v915 = vpow.pop %v914
  %v916 = vadd.f32 %v915, 1.0
  %v917 = vrcp.pop %v916
  %v918 = vmul.f32 %v916, %v917
  %v919 = vsub.f32 1.0, %v918
  %v920 = vmul.f32 %v917, %v919
  %v921 = vadd.f32 %v917, %v920
  %vm922 = vweird.f32 %v916
  %vm923 = vweird.f32 %v917
  %vm924 = vmor %vm922, %vm923
  %v925 = vsel %vm924, %v917, %v921
  %v926 = vand.u32 2147483647, %v916
  %vm927 = vcmp.eq.f32.partialorder %v926, 8.507059e+37
  %v928 = vand.u32 %v916, 2147483648
  %v929 = vor.u32 1.1754944e-38, %v928
  %v930 = vsel %vm927, %v929, %v925
  %v931 = vmul.f32 1.0, %v930
  %v932 = vsub.f32 0.0, %v910
  %v933 = vmul.f32 %v932, 1.442695
  %v934 = vpow.pop %v933
  %v935 = vadd.f32 %v934, 1.0
  %v936 = vrcp.pop %v935
  %v937 = vmul.f32 %v935, %v936
  %v938 = vsub.f32 1.0, %v937
  %v939 = vmul.f32 %v936, %v938
  %v940 = vadd.f32 %v936, %v939
  %vm941 = vweird.f32 %v935
  %vm942 = vweird.f32 %v936
  %vm943 = vmor %vm941, %vm942
  %v944 = vsel %vm943, %v936, %v940
  %v945 = vand.u32 2147483647, %v935
  %vm946 = vcmp.eq.f32.partialorder %v945, 8.507059e+37
  %v947 = vand.u32 %v935, 2147483648
  %v948 = vor.u32 1.1754944e-38, %v947
  %v949 = vsel %vm946, %v948, %v944
  %v950 = vmul.f32 1.0, %v949
  %v951 = vsub.f32 0.0, %v911
  %v952 = vmul.f32 %v951, 1.442695
  %v953 = vpow.pop %v952
  %v954 = vadd.f32 %v953, 1.0
  %v955 = vrcp.pop %v954
  %v956 = vmul.f32 %v954, %v955
  %v957 = vsub.f32 1.0, %v956
  %v958 = vmul.f32 %v955, %v957
  %v959 = vadd.f32 %v955, %v958
  %vm960 = vweird.f32 %v954
  %vm961 = vweird.f32 %v955
  %vm962 = vmor %vm960, %vm961
  %v963 = vsel %vm962, %v955, %v959
  %v964 = vand.u32 2147483647, %v954
  %vm965 = vcmp.eq.f32.partialorder %v964, 8.507059e+37
  %v966 = vand.u32 %v954, 2147483648
  %v967 = vor.u32 1.1754944e-38, %v966
  %v968 = vsel %vm965, %v967, %v963
  %v969 = vmul.f32 1.0, %v968
  %v970 = vtanh.pop %v912
  %v971 = vmul.f32 %v950, %v820
  %v972 = vmul.f32 %v931, %v970
  %v973 = vadd.f32 %v971, %v972
  %v974 = vtanh.pop %v973
  %v975 = vmul.f32 %v969, %v974
  %v976 = vadd.f32 %v823, %v975
  %v977 = vmax.f32 %v824, %v975
  %v978 = vld [vmem:[#allocation2 + $0x80] sm:$0xff]
  %v979 = vld [vmem:[#allocation2 + $0x88] sm:$0xff]
  %v980 = vld [vmem:[#allocation2 + $0x90] sm:$0xff]
  %v981 = vld [vmem:[#allocation2 + $0x98] sm:$0xff]
  %982 = vmatpush.msra.mxu0 %v363
  %983 = vmatpush.msra.mxu0 %v359
  %984 = vmatpush.msra.mxu0 %v355
  %985 = vmatpush.msra.mxu0 %v351
  %986 = vmatpush.msra.mxu0 %v347
  %987 = vmatpush.msra.mxu0 %v343
  %988 = vmatpush.msra.mxu0 %v339
  %989 = vmatpush.msra.mxu0 %v335
  %990 = vmatpush.msra.mxu0 %v331
  %991 = vmatpush.msra.mxu0 %v327
  %992 = vmatpush.msra.mxu0 %v323
  %993 = vmatpush.msra.mxu0 %v319
  %994 = vmatpush.msra.mxu0 %v315
  %995 = vmatpush.msra.mxu0 %v311
  %996 = vmatpush.msra.mxu0 %v307
  %997 = vmatpush.msra.mxu0 %v303
  %998 = vmatmul.f32.gmra.mxu0 %v975
  %v999 = vpop.f32.mrf.mxu0
  %v1000 = vadd.f32 0.0, %v999
  %1001 = vdwg.mxu0
  %1002 = vmatpush.msra.mxu0 %v364
  %1003 = vmatpush.msra.mxu0 %v360
  %1004 = vmatpush.msra.mxu0 %v356
  %1005 = vmatpush.msra.mxu0 %v352
  %1006 = vmatpush.msra.mxu0 %v348
  %1007 = vmatpush.msra.mxu0 %v344
  %1008 = vmatpush.msra.mxu0 %v340
  %1009 = vmatpush.msra.mxu0 %v336
  %1010 = vmatpush.msra.mxu0 %v332
  %1011 = vmatpush.msra.mxu0 %v328
  %1012 = vmatpush.msra.mxu0 %v324
  %1013 = vmatpush.msra.mxu0 %v320
  %1014 = vmatpush.msra.mxu0 %v316
  %1015 = vmatpush.msra.mxu0 %v312
  %1016 = vmatpush.msra.mxu0 %v308
  %1017 = vmatpush.msra.mxu0 %v304
  %1018 = vmatmul.f32.gmra.mxu0 %v975
  %v1019 = vpop.f32.mrf.mxu0
  %v1020 = vadd.f32 0.0, %v1019
  %1021 = vdwg.mxu0
  %1022 = vmatpush.msra.mxu0 %v365
  %1023 = vmatpush.msra.mxu0 %v361
  %1024 = vmatpush.msra.mxu0 %v357
  %1025 = vmatpush.msra.mxu0 %v353
  %1026 = vmatpush.msra.mxu0 %v349
  %1027 = vmatpush.msra.mxu0 %v345
  %1028 = vmatpush.msra.mxu0 %v341
  %1029 = vmatpush.msra.mxu0 %v337
  %1030 = vmatpush.msra.mxu0 %v333
  %1031 = vmatpush.msra.mxu0 %v329
  %1032 = vmatpush.msra.mxu0 %v325
  %1033 = vmatpush.msra.mxu0 %v321
  %1034 = vmatpush.msra.mxu0 %v317
  %1035 = vmatpush.msra.mxu0 %v313
  %1036 = vmatpush.msra.mxu0 %v309
  %1037 = vmatpush.msra.mxu0 %v305
  %1038 = vmatmul.f32.gmra.mxu0 %v975
  %v1039 = vpop.f32.mrf.mxu0
  %v1040 = vadd.f32 0.0, %v1039
  %1041 = vdwg.mxu0
  %1042 = vmatpush.msra.mxu0 %v366
  %1043 = vmatpush.msra.mxu0 %v362
  %1044 = vmatpush.msra.mxu0 %v358
  %1045 = vmatpush.msra.mxu0 %v354
  %1046 = vmatpush.msra.mxu0 %v350
  %1047 = vmatpush.msra.mxu0 %v346
  %1048 = vmatpush.msra.mxu0 %v342
  %1049 = vmatpush.msra.mxu0 %v338
  %1050 = vmatpush.msra.mxu0 %v334
  %1051 = vmatpush.msra.mxu0 %v330
  %1052 = vmatpush.msra.mxu0 %v326
  %1053 = vmatpush.msra.mxu0 %v322
  %1054 = vmatpush.msra.mxu0 %v318
  %1055 = vmatpush.msra.mxu0 %v314
  %1056 = vmatpush.msra.mxu0 %v310
  %1057 = vmatpush.msra.mxu0 %v306
  %1058 = vmatmul.f32.gmra.mxu0 %v975
  %v1059 = vpop.f32.mrf.mxu0
  %v1060 = vadd.f32 0.0, %v1059
  %1061 = vdwg.mxu0
  %v1062 = vadd.f32 %v978, %v1000
  %v1063 = vadd.f32 %v979, %v1020
  %v1064 = vadd.f32 %v980, %v1040
  %v1065 = vadd.f32 %v981, %v1060
  %v1066 = vsub.f32 0.0, %v1062
  %v1067 = vmul.f32 %v1066, 1.442695
  %v1068 = vpow.pop %v1067
  %v1069 = vadd.f32 %v1068, 1.0
  %v1070 = vrcp.pop %v1069
  %v1071 = vmul.f32 %v1069, %v1070
  %v1072 = vsub.f32 1.0, %v1071
  %v1073 = vmul.f32 %v1070, %v1072
  %v1074 = vadd.f32 %v1070, %v1073
  %vm1075 = vweird.f32 %v1069
  %vm1076 = vweird.f32 %v1070
  %vm1077 = vmor %vm1075, %vm1076
  %v1078 = vsel %vm1077, %v1070, %v1074
  %v1079 = vand.u32 2147483647, %v1069
  %vm1080 = vcmp.eq.f32.partialorder %v1079, 8.507059e+37
  %v1081 = vand.u32 %v1069, 2147483648
  %v1082 = vor.u32 1.1754944e-38, %v1081
  %v1083 = vsel %vm1080, %v1082, %v1078
  %v1084 = vmul.f32 1.0, %v1083
  %v1085 = vsub.f32 0.0, %v1063
  %v1086 = vmul.f32 %v1085, 1.442695
  %v1087 = vpow.pop %v1086
  %v1088 = vadd.f32 %v1087, 1.0
  %v1089 = vrcp.pop %v1088
  %v1090 = vmul.f32 %v1088, %v1089
  %v1091 = vsub.f32 1.0, %v1090
  %v1092 = vmul.f32 %v1089, %v1091
  %v1093 = vadd.f32 %v1089, %v1092
  %vm1094 = vweird.f32 %v1088
  %vm1095 = vweird.f32 %v1089
  %vm1096 = vmor %vm1094, %vm1095
  %v1097 = vsel %vm1096, %v1089, %v1093
  %v1098 = vand.u32 2147483647, %v1088
  %vm1099 = vcmp.eq.f32.partialorder %v1098, 8.507059e+37
  %v1100 = vand.u32 %v1088, 2147483648
  %v1101 = vor.u32 1.1754944e-38, %v1100
  %v1102 = vsel %vm1099, %v1101, %v1097
  %v1103 = vmul.f32 1.0, %v1102
  %v1104 = vsub.f32 0.0, %v1064
  %v1105 = vmul.f32 %v1104, 1.442695
  %v1106 = vpow.pop %v1105
  %v1107 = vadd.f32 %v1106, 1.0
  %v1108 = vrcp.pop %v1107
  %v1109 = vmul.f32 %v1107, %v1108
  %v1110 = vsub.f32 1.0, %v1109
  %v1111 = vmul.f32 %v1108, %v1110
  %v1112 = vadd.f32 %v1108, %v1111
  %vm1113 = vweird.f32 %v1107
  %vm1114 = vweird.f32 %v1108
  %vm1115 = vmor %vm1113, %vm1114
  %v1116 = vsel %vm1115, %v1108, %v1112
  %v1117 = vand.u32 2147483647, %v1107
  %vm1118 = vcmp.eq.f32.partialorder %v1117, 8.507059e+37
  %v1119 = vand.u32 %v1107, 2147483648
  %v1120 = vor.u32 1.1754944e-38, %v1119
  %v1121 = vsel %vm1118, %v1120, %v1116
  %v1122 = vmul.f32 1.0, %v1121
  %v1123 = vtanh.pop %v1065
  %v1124 = vmul.f32 %v1103, %v973
  %v1125 = vmul.f32 %v1084, %v1123
  %v1126 = vadd.f32 %v1124, %v1125
  %v1127 = vtanh.pop %v1126
  %v1128 = vmul.f32 %v1122, %v1127
  %v1129 = vadd.f32 %v976, %v1128
  %v1130 = vmax.f32 %v977, %v1128
  %v1131 = vld [vmem:[#allocation2 + $0xa0] sm:$0xff]
  %v1132 = vld [vmem:[#allocation2 + $0xa8] sm:$0xff]
  %v1133 = vld [vmem:[#allocation2 + $0xb0] sm:$0xff]
  %v1134 = vld [vmem:[#allocation2 + $0xb8] sm:$0xff]
  %1135 = vmatpush.msra.mxu0 %v363
  %1136 = vmatpush.msra.mxu0 %v359
  %1137 = vmatpush.msra.mxu0 %v355
  %1138 = vmatpush.msra.mxu0 %v351
  %1139 = vmatpush.msra.mxu0 %v347
  %1140 = vmatpush.msra.mxu0 %v343
  %1141 = vmatpush.msra.mxu0 %v339
  %1142 = vmatpush.msra.mxu0 %v335
  %1143 = vmatpush.msra.mxu0 %v331
  %1144 = vmatpush.msra.mxu0 %v327
  %1145 = vmatpush.msra.mxu0 %v323
  %1146 = vmatpush.msra.mxu0 %v319
  %1147 = vmatpush.msra.mxu0 %v315
  %1148 = vmatpush.msra.mxu0 %v311
  %1149 = vmatpush.msra.mxu0 %v307
  %1150 = vmatpush.msra.mxu0 %v303
  %1151 = vmatmul.f32.gmra.mxu0 %v1128
  %v1152 = vpop.f32.mrf.mxu0
  %v1153 = vadd.f32 0.0, %v1152
  %1154 = vdwg.mxu0
  %1155 = vmatpush.msra.mxu0 %v364
  %1156 = vmatpush.msra.mxu0 %v360
  %1157 = vmatpush.msra.mxu0 %v356
  %1158 = vmatpush.msra.mxu0 %v352
  %1159 = vmatpush.msra.mxu0 %v348
  %1160 = vmatpush.msra.mxu0 %v344
  %1161 = vmatpush.msra.mxu0 %v340
  %1162 = vmatpush.msra.mxu0 %v336
  %1163 = vmatpush.msra.mxu0 %v332
  %1164 = vmatpush.msra.mxu0 %v328
  %1165 = vmatpush.msra.mxu0 %v324
  %1166 = vmatpush.msra.mxu0 %v320
  %1167 = vmatpush.msra.mxu0 %v316
  %1168 = vmatpush.msra.mxu0 %v312
  %1169 = vmatpush.msra.mxu0 %v308
  %1170 = vmatpush.msra.mxu0 %v304
  %1171 = vmatmul.f32.gmra.mxu0 %v1128
  %v1172 = vpop.f32.mrf.mxu0
  %v1173 = vadd.f32 0.0, %v1172
  %1174 = vdwg.mxu0
  %1175 = vmatpush.msra.mxu0 %v365
  %1176 = vmatpush.msra.mxu0 %v361
  %1177 = vmatpush.msra.mxu0 %v357
  %1178 = vmatpush.msra.mxu0 %v353
  %1179 = vmatpush.msra.mxu0 %v349
  %1180 = vmatpush.msra.mxu0 %v345
  %1181 = vmatpush.msra.mxu0 %v341
  %1182 = vmatpush.msra.mxu0 %v337
  %1183 = vmatpush.msra.mxu0 %v333
  %1184 = vmatpush.msra.mxu0 %v329
  %1185 = vmatpush.msra.mxu0 %v325
  %1186 = vmatpush.msra.mxu0 %v321
  %1187 = vmatpush.msra.mxu0 %v317
  %1188 = vmatpush.msra.mxu0 %v313
  %1189 = vmatpush.msra.mxu0 %v309
  %1190 = vmatpush.msra.mxu0 %v305
  %1191 = vmatmul.f32.gmra.mxu0 %v1128
  %v1192 = vpop.f32.mrf.mxu0
  %v1193 = vadd.f32 0.0, %v1192
  %1194 = vdwg.mxu0
  %1195 = vmatpush.msra.mxu0 %v366
  %1196 = vmatpush.msra.mxu0 %v362
  %1197 = vmatpush.msra.mxu0 %v358
  %1198 = vmatpush.msra.mxu0 %v354
  %1199 = vmatpush.msra.mxu0 %v350
  %1200 = vmatpush.msra.mxu0 %v346
  %1201 = vmatpush.msra.mxu0 %v342
  %1202 = vmatpush.msra.mxu0 %v338
  %1203 = vmatpush.msra.mxu0 %v334
  %1204 = vmatpush.msra.mxu0 %v330
  %1205 = vmatpush.msra.mxu0 %v326
  %1206 = vmatpush.msra.mxu0 %v322
  %1207 = vmatpush.msra.mxu0 %v318
  %1208 = vmatpush.msra.mxu0 %v314
  %1209 = vmatpush.msra.mxu0 %v310
  %1210 = vmatpush.msra.mxu0 %v306
  %1211 = vmatmul.f32.gmra.mxu0 %v1128
  %v1212 = vpop.f32.mrf.mxu0
  %v1213 = vadd.f32 0.0, %v1212
  %1214 = vdwg.mxu0
  %v1215 = vadd.f32 %v1131, %v1153
  %v1216 = vadd.f32 %v1132, %v1173
  %v1217 = vadd.f32 %v1133, %v1193
  %v1218 = vadd.f32 %v1134, %v1213
  %v1219 = vsub.f32 0.0, %v1215
  %v1220 = vmul.f32 %v1219, 1.442695
  %v1221 = vpow.pop %v1220
  %v1222 = vadd.f32 %v1221, 1.0
  %v1223 = vrcp.pop %v1222
  %v1224 = vmul.f32 %v1222, %v1223
  %v1225 = vsub.f32 1.0, %v1224
  %v1226 = vmul.f32 %v1223, %v1225
  %v1227 = vadd.f32 %v1223, %v1226
  %vm1228 = vweird.f32 %v1222
  %vm1229 = vweird.f32 %v1223
  %vm1230 = vmor %vm1228, %vm1229
  %v1231 = vsel %vm1230, %v1223, %v1227
  %v1232 = vand.u32 2147483647, %v1222
  %vm1233 = vcmp.eq.f32.partialorder %v1232, 8.507059e+37
  %v1234 = vand.u32 %v1222, 2147483648
  %v1235 = vor.u32 1.1754944e-38, %v1234
  %v1236 = vsel %vm1233, %v1235, %v1231
  %v1237 = vmul.f32 1.0, %v1236
  %v1238 = vsub.f32 0.0, %v1216
  %v1239 = vmul.f32 %v1238, 1.442695
  %v1240 = vpow.pop %v1239
  %v1241 = vadd.f32 %v1240, 1.0
  %v1242 = vrcp.pop %v1241
  %v1243 = vmul.f32 %v1241, %v1242
  %v1244 = vsub.f32 1.0, %v1243
  %v1245 = vmul.f32 %v1242, %v1244
  %v1246 = vadd.f32 %v1242, %v1245
  %vm1247 = vweird.f32 %v1241
  %vm1248 = vweird.f32 %v1242
  %vm1249 = vmor %vm1247, %vm1248
  %v1250 = vsel %vm1249, %v1242, %v1246
  %v1251 = vand.u32 2147483647, %v1241
  %vm1252 = vcmp.eq.f32.partialorder %v1251, 8.507059e+37
  %v1253 = vand.u32 %v1241, 2147483648
  %v1254 = vor.u32 1.1754944e-38, %v1253
  %v1255 = vsel %vm1252, %v1254, %v1250
  %v1256 = vmul.f32 1.0, %v1255
  %v1257 = vsub.f32 0.0, %v1217
  %v1258 = vmul.f32 %v1257, 1.442695
  %v1259 = vpow.pop %v1258
  %v1260 = vadd.f32 %v1259, 1.0
  %v1261 = vrcp.pop %v1260
  %v1262 = vmul.f32 %v1260, %v1261
  %v1263 = vsub.f32 1.0, %v1262
  %v1264 = vmul.f32 %v1261, %v1263
  %v1265 = vadd.f32 %v1261, %v1264
  %vm1266 = vweird.f32 %v1260
  %vm1267 = vweird.f32 %v1261
  %vm1268 = vmor %vm1266, %vm1267
  %v1269 = vsel %vm1268, %v1261, %v1265
  %v1270 = vand.u32 2147483647, %v1260
  %vm1271 = vcmp.eq.f32.partialorder %v1270, 8.507059e+37
  %v1272 = vand.u32 %v1260, 2147483648
  %v1273 = vor.u32 1.1754944e-38, %v1272
  %v1274 = vsel %vm1271, %v1273, %v1269
  %v1275 = vmul.f32 1.0, %v1274
  %v1276 = vtanh.pop %v1218
  %v1277 = vmul.f32 %v1256, %v1126
  %v1278 = vmul.f32 %v1237, %v1276
  %v1279 = vadd.f32 %v1277, %v1278
  %v1280 = vtanh.pop %v1279
  %v1281 = vmul.f32 %v1275, %v1280
  %v1282 = vadd.f32 %v1129, %v1281
  %v1283 = vmax.f32 %v1130, %v1281
  %v1284 = vld [vmem:[#allocation2 + $0xc0] sm:$0xff]
  %v1285 = vld [vmem:[#allocation2 + $0xc8] sm:$0xff]
  %v1286 = vld [vmem:[#allocation2 + $0xd0] sm:$0xff]
  %v1287 = vld [vmem:[#allocation2 + $0xd8] sm:$0xff]
  %1288 = vmatpush.msra.mxu0 %v363
  %1289 = vmatpush.msra.mxu0 %v359
  %1290 = vmatpush.msra.mxu0 %v355
  %1291 = vmatpush.msra.mxu0 %v351
  %1292 = vmatpush.msra.mxu0 %v347
  %1293 = vmatpush.msra.mxu0 %v343
  %1294 = vmatpush.msra.mxu0 %v339
  %1295 = vmatpush.msra.mxu0 %v335
  %1296 = vmatpush.msra.mxu0 %v331
  %1297 = vmatpush.msra.mxu0 %v327
  %1298 = vmatpush.msra.mxu0 %v323
  %1299 = vmatpush.msra.mxu0 %v319
  %1300 = vmatpush.msra.mxu0 %v315
  %1301 = vmatpush.msra.mxu0 %v311
  %1302 = vmatpush.msra.mxu0 %v307
  %1303 = vmatpush.msra.mxu0 %v303
  %1304 = vmatmul.f32.gmra.mxu0 %v1281
  %v1305 = vpop.f32.mrf.mxu0
  %v1306 = vadd.f32 0.0, %v1305
  %1307 = vdwg.mxu0
  %1308 = vmatpush.msra.mxu0 %v364
  %1309 = vmatpush.msra.mxu0 %v360
  %1310 = vmatpush.msra.mxu0 %v356
  %1311 = vmatpush.msra.mxu0 %v352
  %1312 = vmatpush.msra.mxu0 %v348
  %1313 = vmatpush.msra.mxu0 %v344
  %1314 = vmatpush.msra.mxu0 %v340
  %1315 = vmatpush.msra.mxu0 %v336
  %1316 = vmatpush.msra.mxu0 %v332
  %1317 = vmatpush.msra.mxu0 %v328
  %1318 = vmatpush.msra.mxu0 %v324
  %1319 = vmatpush.msra.mxu0 %v320
  %1320 = vmatpush.msra.mxu0 %v316
  %1321 = vmatpush.msra.mxu0 %v312
  %1322 = vmatpush.msra.mxu0 %v308
  %1323 = vmatpush.msra.mxu0 %v304
  %1324 = vmatmul.f32.gmra.mxu0 %v1281
  %v1325 = vpop.f32.mrf.mxu0
  %v1326 = vadd.f32 0.0, %v1325
  %1327 = vdwg.mxu0
  %1328 = vmatpush.msra.mxu0 %v365
  %1329 = vmatpush.msra.mxu0 %v361
  %1330 = vmatpush.msra.mxu0 %v357
  %1331 = vmatpush.msra.mxu0 %v353
  %1332 = vmatpush.msra.mxu0 %v349
  %1333 = vmatpush.msra.mxu0 %v345
  %1334 = vmatpush.msra.mxu0 %v341
  %1335 = vmatpush.msra.mxu0 %v337
  %1336 = vmatpush.msra.mxu0 %v333
  %1337 = vmatpush.msra.mxu0 %v329
  %1338 = vmatpush.msra.mxu0 %v325
  %1339 = vmatpush.msra.mxu0 %v321
  %1340 = vmatpush.msra.mxu0 %v317
  %1341 = vmatpush.msra.mxu0 %v313
  %1342 = vmatpush.msra.mxu0 %v309
  %1343 = vmatpush.msra.mxu0 %v305
  %1344 = vmatmul.f32.gmra.mxu0 %v1281
  %v1345 = vpop.f32.mrf.mxu0
  %v1346 = vadd.f32 0.0, %v1345
  %1347 = vdwg.mxu0
  %1348 = vmatpush.msra.mxu0 %v366
  %1349 = vmatpush.msra.mxu0 %v362
  %1350 = vmatpush.msra.mxu0 %v358
  %1351 = vmatpush.msra.mxu0 %v354
  %1352 = vmatpush.msra.mxu0 %v350
  %1353 = vmatpush.msra.mxu0 %v346
  %1354 = vmatpush.msra.mxu0 %v342
  %1355 = vmatpush.msra.mxu0 %v338
  %1356 = vmatpush.msra.mxu0 %v334
  %1357 = vmatpush.msra.mxu0 %v330
  %1358 = vmatpush.msra.mxu0 %v326
  %1359 = vmatpush.msra.mxu0 %v322
  %1360 = vmatpush.msra.mxu0 %v318
  %1361 = vmatpush.msra.mxu0 %v314
  %1362 = vmatpush.msra.mxu0 %v310
  %1363 = vmatpush.msra.mxu0 %v306
  %1364 = vmatmul.f32.gmra.mxu0 %v1281
  %v1365 = vpop.f32.mrf.mxu0
  %v1366 = vadd.f32 0.0, %v1365
  %1367 = vdwg.mxu0
  %v1368 = vadd.f32 %v1284, %v1306
  %v1369 = vadd.f32 %v1285, %v1326
  %v1370 = vadd.f32 %v1286, %v1346
  %v1371 = vadd.f32 %v1287, %v1366
  %v1372 = vsub.f32 0.0, %v1368
  %v1373 = vmul.f32 %v1372, 1.442695
  %v1374 = vpow.pop %v1373
  %v1375 = vadd.f32 %v1374, 1.0
  %v1376 = vrcp.pop %v1375
  %v1377 = vmul.f32 %v1375, %v1376
  %v1378 = vsub.f32 1.0, %v1377
  %v1379 = vmul.f32 %v1376, %v1378
  %v1380 = vadd.f32 %v1376, %v1379
  %vm1381 = vweird.f32 %v1375
  %vm1382 = vweird.f32 %v1376
  %vm1383 = vmor %vm1381, %vm1382
  %v1384 = vsel %vm1383, %v1376, %v1380
  %v1385 = vand.u32 2147483647, %v1375
  %vm1386 = vcmp.eq.f32.partialorder %v1385, 8.507059e+37
  %v1387 = vand.u32 %v1375, 2147483648
  %v1388 = vor.u32 1.1754944e-38, %v1387
  %v1389 = vsel %vm1386, %v1388, %v1384
  %v1390 = vmul.f32 1.0, %v1389
  %v1391 = vsub.f32 0.0, %v1369
  %v1392 = vmul.f32 %v1391, 1.442695
  %v1393 = vpow.pop %v1392
  %v1394 = vadd.f32 %v1393, 1.0
  %v1395 = vrcp.pop %v1394
  %v1396 = vmul.f32 %v1394, %v1395
  %v1397 = vsub.f32 1.0, %v1396
  %v1398 = vmul.f32 %v1395, %v1397
  %v1399 = vadd.f32 %v1395, %v1398
  %vm1400 = vweird.f32 %v1394
  %vm1401 = vweird.f32 %v1395
  %vm1402 = vmor %vm1400, %vm1401
  %v1403 = vsel %vm1402, %v1395, %v1399
  %v1404 = vand.u32 2147483647, %v1394
  %vm1405 = vcmp.eq.f32.partialorder %v1404, 8.507059e+37
  %v1406 = vand.u32 %v1394, 2147483648
  %v1407 = vor.u32 1.1754944e-38, %v1406
  %v1408 = vsel %vm1405, %v1407, %v1403
  %v1409 = vmul.f32 1.0, %v1408
  %v1410 = vsub.f32 0.0, %v1370
  %v1411 = vmul.f32 %v1410, 1.442695
  %v1412 = vpow.pop %v1411
  %v1413 = vadd.f32 %v1412, 1.0
  %v1414 = vrcp.pop %v1413
  %v1415 = vmul.f32 %v1413, %v1414
  %v1416 = vsub.f32 1.0, %v1415
  %v1417 = vmul.f32 %v1414, %v1416
  %v1418 = vadd.f32 %v1414, %v1417
  %vm1419 = vweird.f32 %v1413
  %vm1420 = vweird.f32 %v1414
  %vm1421 = vmor %vm1419, %vm1420
  %v1422 = vsel %vm1421, %v1414, %v1418
  %v1423 = vand.u32 2147483647, %v1413
  %vm1424 = vcmp.eq.f32.partialorder %v1423, 8.507059e+37
  %v1425 = vand.u32 %v1413, 2147483648
  %v1426 = vor.u32 1.1754944e-38, %v1425
  %v1427 = vsel %vm1424, %v1426, %v1422
  %v1428 = vmul.f32 1.0, %v1427
  %v1429 = vtanh.pop %v1371
  %v1430 = vmul.f32 %v1409, %v1279
  %v1431 = vmul.f32 %v1390, %v1429
  %v1432 = vadd.f32 %v1430, %v1431
  %v1433 = vtanh.pop %v1432
  %v1434 = vmul.f32 %v1428, %v1433
  %v1435 = vadd.f32 %v1282, %v1434
  %v1436 = vmax.f32 %v1283, %v1434
  %v1437 = vld [vmem:[#allocation2 + $0xe0] sm:$0xff]
  %v1438 = vld [vmem:[#allocation2 + $0xe8] sm:$0xff]
  %v1439 = vld [vmem:[#allocation2 + $0xf0] sm:$0xff]
  %v1440 = vld [vmem:[#allocation2 + $0xf8] sm:$0xff]
  %1441 = vmatpush.msra.mxu0 %v363
  %1442 = vmatpush.msra.mxu0 %v359
  %1443 = vmatpush.msra.mxu0 %v355
  %1444 = vmatpush.msra.mxu0 %v351
  %1445 = vmatpush.msra.mxu0 %v347
  %1446 = vmatpush.msra.mxu0 %v343
  %1447 = vmatpush.msra.mxu0 %v339
  %1448 = vmatpush.msra.mxu0 %v335
  %1449 = vmatpush.msra.mxu0 %v331
  %1450 = vmatpush.msra.mxu0 %v327
  %1451 = vmatpush.msra.mxu0 %v323
  %1452 = vmatpush.msra.mxu0 %v319
  %1453 = vmatpush.msra.mxu0 %v315
  %1454 = vmatpush.msra.mxu0 %v311
  %1455 = vmatpush.msra.mxu0 %v307
  %1456 = vmatpush.msra.mxu0 %v303
  %1457 = vmatmul.f32.gmra.mxu0 %v1434
  %v1458 = vpop.f32.mrf.mxu0
  %v1459 = vadd.f32 0.0, %v1458
  %1460 = vdwg.mxu0
  %1461 = vmatpush.msra.mxu0 %v364
  %1462 = vmatpush.msra.mxu0 %v360
  %1463 = vmatpush.msra.mxu0 %v356
  %1464 = vmatpush.msra.mxu0 %v352
  %1465 = vmatpush.msra.mxu0 %v348
  %1466 = vmatpush.msra.mxu0 %v344
  %1467 = vmatpush.msra.mxu0 %v340
  %1468 = vmatpush.msra.mxu0 %v336
  %1469 = vmatpush.msra.mxu0 %v332
  %1470 = vmatpush.msra.mxu0 %v328
  %1471 = vmatpush.msra.mxu0 %v324
  %1472 = vmatpush.msra.mxu0 %v320
  %1473 = vmatpush.msra.mxu0 %v316
  %1474 = vmatpush.msra.mxu0 %v312
  %1475 = vmatpush.msra.mxu0 %v308
  %1476 = vmatpush.msra.mxu0 %v304
  %1477 = vmatmul.f32.gmra.mxu0 %v1434
  %v1478 = vpop.f32.mrf.mxu0
  %v1479 = vadd.f32 0.0, %v1478
  %1480 = vdwg.mxu0
  %1481 = vmatpush.msra.mxu0 %v365
  %1482 = vmatpush.msra.mxu0 %v361
  %1483 = vmatpush.msra.mxu0 %v357
  %1484 = vmatpush.msra.mxu0 %v353
  %1485 = vmatpush.msra.mxu0 %v349
  %1486 = vmatpush.msra.mxu0 %v345
  %1487 = vmatpush.msra.mxu0 %v341
  %1488 = vmatpush.msra.mxu0 %v337
  %1489 = vmatpush.msra.mxu0 %v333
  %1490 = vmatpush.msra.mxu0 %v329
  %1491 = vmatpush.msra.mxu0 %v325
  %1492 = vmatpush.msra.mxu0 %v321
  %1493 = vmatpush.msra.mxu0 %v317
  %1494 = vmatpush.msra.mxu0 %v313
  %1495 = vmatpush.msra.mxu0 %v309
  %1496 = vmatpush.msra.mxu0 %v305
  %1497 = vmatmul.f32.gmra.mxu0 %v1434
  %v1498 = vpop.f32.mrf.mxu0
  %v1499 = vadd.f32 0.0, %v1498
  %1500 = vdwg.mxu0
  %1501 = vmatpush.msra.mxu0 %v366
  %1502 = vmatpush.msra.mxu0 %v362
  %1503 = vmatpush.msra.mxu0 %v358
  %1504 = vmatpush.msra.mxu0 %v354
  %1505 = vmatpush.msra.mxu0 %v350
  %1506 = vmatpush.msra.mxu0 %v346
  %1507 = vmatpush.msra.mxu0 %v342
  %1508 = vmatpush.msra.mxu0 %v338
  %1509 = vmatpush.msra.mxu0 %v334
  %1510 = vmatpush.msra.mxu0 %v330
  %1511 = vmatpush.msra.mxu0 %v326
  %1512 = vmatpush.msra.mxu0 %v322
  %1513 = vmatpush.msra.mxu0 %v318
  %1514 = vmatpush.msra.mxu0 %v314
  %1515 = vmatpush.msra.mxu0 %v310
  %1516 = vmatpush.msra.mxu0 %v306
  %1517 = vmatmul.f32.gmra.mxu0 %v1434
  %v1518 = vpop.f32.mrf.mxu0
  %v1519 = vadd.f32 0.0, %v1518
  %1520 = vdwg.mxu0
  %v1521 = vadd.f32 %v1437, %v1459
  %v1522 = vadd.f32 %v1438, %v1479
  %v1523 = vadd.f32 %v1439, %v1499
  %v1524 = vadd.f32 %v1440, %v1519
  %v1525 = vsub.f32 0.0, %v1521
  %v1526 = vmul.f32 %v1525, 1.442695
  %v1527 = vpow.pop %v1526
  %v1528 = vadd.f32 %v1527, 1.0
  %v1529 = vrcp.pop %v1528
  %v1530 = vmul.f32 %v1528, %v1529
  %v1531 = vsub.f32 1.0, %v1530
  %v1532 = vmul.f32 %v1529, %v1531
  %v1533 = vadd.f32 %v1529, %v1532
  %vm1534 = vweird.f32 %v1528
  %vm1535 = vweird.f32 %v1529
  %vm1536 = vmor %vm1534, %vm1535
  %v1537 = vsel %vm1536, %v1529, %v1533
  %v1538 = vand.u32 2147483647, %v1528
  %vm1539 = vcmp.eq.f32.partialorder %v1538, 8.507059e+37
  %v1540 = vand.u32 %v1528, 2147483648
  %v1541 = vor.u32 1.1754944e-38, %v1540
  %v1542 = vsel %vm1539, %v1541, %v1537
  %v1543 = vmul.f32 1.0, %v1542
  %v1544 = vsub.f32 0.0, %v1522
  %v1545 = vmul.f32 %v1544, 1.442695
  %v1546 = vpow.pop %v1545
  %v1547 = vadd.f32 %v1546, 1.0
  %v1548 = vrcp.pop %v1547
  %v1549 = vmul.f32 %v1547, %v1548
  %v1550 = vsub.f32 1.0, %v1549
  %v1551 = vmul.f32 %v1548, %v1550
  %v1552 = vadd.f32 %v1548, %v1551
  %vm1553 = vweird.f32 %v1547
  %vm1554 = vweird.f32 %v1548
  %vm1555 = vmor %vm1553, %vm1554
  %v1556 = vsel %vm1555, %v1548, %v1552
  %v1557 = vand.u32 2147483647, %v1547
  %vm1558 = vcmp.eq.f32.partialorder %v1557, 8.507059e+37
  %v1559 = vand.u32 %v1547, 2147483648
  %v1560 = vor.u32 1.1754944e-38, %v1559
  %v1561 = vsel %vm1558, %v1560, %v1556
  %v1562 = vmul.f32 1.0, %v1561
  %v1563 = vsub.f32 0.0, %v1523
  %v1564 = vmul.f32 %v1563, 1.442695
  %v1565 = vpow.pop %v1564
  %v1566 = vadd.f32 %v1565, 1.0
  %v1567 = vrcp.pop %v1566
  %v1568 = vmul.f32 %v1566, %v1567
  %v1569 = vsub.f32 1.0, %v1568
  %v1570 = vmul.f32 %v1567, %v1569
  %v1571 = vadd.f32 %v1567, %v1570
  %vm1572 = vweird.f32 %v1566
  %vm1573 = vweird.f32 %v1567
  %vm1574 = vmor %vm1572, %vm1573
  %v1575 = vsel %vm1574, %v1567, %v1571
  %v1576 = vand.u32 2147483647, %v1566
  %vm1577 = vcmp.eq.f32.partialorder %v1576, 8.507059e+37
  %v1578 = vand.u32 %v1566, 2147483648
  %v1579 = vor.u32 1.1754944e-38, %v1578
  %v1580 = vsel %vm1577, %v1579, %v1575
  %v1581 = vmul.f32 1.0, %v1580
  %v1582 = vtanh.pop %v1524
  %v1583 = vmul.f32 %v1562, %v1432
  %v1584 = vmul.f32 %v1543, %v1582
  %v1585 = vadd.f32 %v1583, %v1584
  %v1586 = vtanh.pop %v1585
  %v1587 = vmul.f32 %v1581, %v1586
  %v1588 = vadd.f32 %v1435, %v1587
  %v1589 = vmax.f32 %v1436, %v1587
  %v1590 = vld [vmem:[%s4] sm:$0xff]
  %v1591 = vld [vmem:[%s4 + $0x8] sm:$0xff]
  %v1592 = vld [vmem:[%s4 + $0x10] sm:$0xff]
  %v1593 = vld [vmem:[%s4 + $0x18] sm:$0xff]
  %v1594 = vld [vmem:[%s4 + $0x20] sm:$0xff]
  %v1595 = vld [vmem:[%s4 + $0x28] sm:$0xff]
  %v1596 = vld [vmem:[%s4 + $0x30] sm:$0xff]
  %v1597 = vld [vmem:[%s4 + $0x38] sm:$0xff]
  %v1598 = vld [vmem:[%s4 + $0x40] sm:$0xff]
  %v1599 = vld [vmem:[%s4 + $0x48] sm:$0xff]
  %v1600 = vld [vmem:[%s4 + $0x50] sm:$0xff]
  %v1601 = vld [vmem:[%s4 + $0x58] sm:$0xff]
  %v1602 = vld [vmem:[%s4 + $0x60] sm:$0xff]
  %v1603 = vld [vmem:[%s4 + $0x68] sm:$0xff]
  %v1604 = vld [vmem:[%s4 + $0x70] sm:$0xff]
  %v1605 = vld [vmem:[%s4 + $0x78] sm:$0xff]
  %1606 = vmatpush.msra.mxu0 %v1605
  %1607 = vmatpush.msra.mxu0 %v1604
  %1608 = vmatpush.msra.mxu0 %v1603
  %1609 = vmatpush.msra.mxu0 %v1602
  %1610 = vmatpush.msra.mxu0 %v1601
  %1611 = vmatpush.msra.mxu0 %v1600
  %1612 = vmatpush.msra.mxu0 %v1599
  %1613 = vmatpush.msra.mxu0 %v1598
  %1614 = vmatpush.msra.mxu0 %v1597
  %1615 = vmatpush.msra.mxu0 %v1596
  %1616 = vmatpush.msra.mxu0 %v1595
  %1617 = vmatpush.msra.mxu0 %v1594
  %1618 = vmatpush.msra.mxu0 %v1593
  %1619 = vmatpush.msra.mxu0 %v1592
  %1620 = vmatpush.msra.mxu0 %v1591
  %1621 = vmatpush.msra.mxu0 %v1590
  %1622 = vmatmul.f32.gmra.mxu0 %v1588
  %v1623 = vpop.f32.mrf.mxu0
  %v1624 = vadd.f32 0.0, %v1623
  %1625 = vdwg.mxu0
  %v1626 = vmul.f32 %v1624, 0.125
  %v1627 = vld [vmem:[%s5] sm:$0xff]
  %v1628 = vld [vmem:[%s5 + $0x8] sm:$0xff]
  %v1629 = vld [vmem:[%s5 + $0x10] sm:$0xff]
  %v1630 = vld [vmem:[%s5 + $0x18] sm:$0xff]
  %v1631 = vld [vmem:[%s5 + $0x20] sm:$0xff]
  %v1632 = vld [vmem:[%s5 + $0x28] sm:$0xff]
  %v1633 = vld [vmem:[%s5 + $0x30] sm:$0xff]
  %v1634 = vld [vmem:[%s5 + $0x38] sm:$0xff]
  %v1635 = vld [vmem:[%s5 + $0x40] sm:$0xff]
  %v1636 = vld [vmem:[%s5 + $0x48] sm:$0xff]
  %v1637 = vld [vmem:[%s5 + $0x50] sm:$0xff]
  %v1638 = vld [vmem:[%s5 + $0x58] sm:$0xff]
  %v1639 = vld [vmem:[%s5 + $0x60] sm:$0xff]
  %v1640 = vld [vmem:[%s5 + $0x68] sm:$0xff]
  %v1641 = vld [vmem:[%s5 + $0x70] sm:$0xff]
  %v1642 = vld [vmem:[%s5 + $0x78] sm:$0xff]
  %1643 = vmatpush.msra.mxu0 %v1642
  %1644 = vmatpush.msra.mxu0 %v1641
  %1645 = vmatpush.msra.mxu0 %v1640
  %1646 = vmatpush.msra.mxu0 %v1639
  %1647 = vmatpush.msra.mxu0 %v1638
  %1648 = vmatpush.msra.mxu0 %v1637
  %1649 = vmatpush.msra.mxu0 %v1636
  %1650 = vmatpush.msra.mxu0 %v1635
  %1651 = vmatpush.msra.mxu0 %v1634
  %1652 = vmatpush.msra.mxu0 %v1633
  %1653 = vmatpush.msra.mxu0 %v1632
  %1654 = vmatpush.msra.mxu0 %v1631
  %1655 = vmatpush.msra.mxu0 %v1630
  %1656 = vmatpush.msra.mxu0 %v1629
  %1657 = vmatpush.msra.mxu0 %v1628
  %1658 = vmatpush.msra.mxu0 %v1627
  %1659 = vmatmul.f32.gmra.mxu0 %v1589
  %v1660 = vpop.f32.mrf.mxu0
  %v1661 = vadd.f32 0.0, %v1660
  %1662 = vdwg.mxu0
  %v1663 = vadd.f32 %v1626, %v1661
  %v1664 = vld [vmem:[%s6] sm:$0x1]
  %v1666 = vperm.slane %v1664, 0
  %v1668 = vadd.f32 %v1663, %v1666
  %v1669 = vmax.f32 %v1668, 0.0
  %v1670 = vld [vmem:[%s7] sm:$0xff]
  %v1671 = vld [vmem:[%s7 + $0x8] sm:$0xff]
  %v1672 = vld [vmem:[%s7 + $0x10] sm:$0xff]
  %v1673 = vld [vmem:[%s7 + $0x18] sm:$0xff]
  %v1674 = vld [vmem:[%s7 + $0x20] sm:$0xff]
  %v1675 = vld [vmem:[%s7 + $0x28] sm:$0xff]
  %v1676 = vld [vmem:[%s7 + $0x30] sm:$0xff]
  %v1677 = vld [vmem:[%s7 + $0x38] sm:$0xff]
  %v1678 = vld [vmem:[%s8] sm:$0x1]
  %v1680 = vperm.slane %v1678, 0
  %v1683 = vsel %vm82, %v1669, 0
  %1685 = vmatpush.msra.mxu0 0.0
  %1686 = vmatpush.msra.mxu0 0.0
  %1687 = vmatpush.msra.mxu0 0.0
  %1688 = vmatpush.msra.mxu0 0.0
  %1689 = vmatpush.msra.mxu0 0.0
  %1690 = vmatpush.msra.mxu0 0.0
  %1691 = vmatpush.msra.mxu0 0.0
  %1692 = vmatpush.msra.mxu0 0.0
  %1693 = vmatpush.msra.mxu0 %v1677
  %1694 = vmatpush.msra.mxu0 %v1676
  %1695 = vmatpush.msra.mxu0 %v1675
  %1696 = vmatpush.msra.mxu0 %v1674
  %1697 = vmatpush.msra.mxu0 %v1673
  %1698 = vmatpush.msra.mxu0 %v1672
  %1699 = vmatpush.msra.mxu0 %v1671
  %1700 = vmatpush.msra.mxu0 %v1670
  %1701 = vmatmul.f32.gmra.mxu0 %v1683
  %v1702 = vpop.f32.mrf.mxu0
  %v1703 = vadd.f32 %v1680, %v1702
  %1704 = vdwg.mxu0
  %v1705 = vsub.f32 0.0, %v1703
  %v1706 = vmul.f32 %v1705, 1.442695
  %v1707 = vpow.pop %v1706
  %v1708 = vadd.f32 %v1707, 1.0
  %v1709 = vrcp.pop %v1708
  %v1710 = vmul.f32 %v1708, %v1709
  %v1711 = vsub.f32 1.0, %v1710
  %v1712 = vmul.f32 %v1709, %v1711
  %v1713 = vadd.f32 %v1709, %v1712
  %vm1714 = vweird.f32 %v1708
  %vm1715 = vweird.f32 %v1709
  %vm1716 = vmor %vm1714, %vm1715
  %v1717 = vsel %vm1716, %v1709, %v1713
  %v1718 = vand.u32 2147483647, %v1708
  %vm1719 = vcmp.eq.f32.partialorder %v1718, 8.507059e+37
  %v1720 = vand.u32 %v1708, 2147483648
  %v1721 = vor.u32 1.1754944e-38, %v1720
  %v1722 = vsel %vm1719, %v1721, %v1717
  %v1723 = vmul.f32 1.0, %v1722
  %1724 = vst [vmem:[%s9] sm:$0xff] %v1723
  // Predicated region
  $region38: #{bilstm_forward.1} parent=0 // pred_check
    _
  $region39: #{bilstm_forward.1} parent=0 // pred_check_branch
    %1726 = sbr.rel (0) target = $region41
  $region40: #{bilstm_forward.1} parent=0 // pred_region
    _
  $region41: #{bilstm_forward.1} parent=0 // pred_fallthru
    _
  // Predicated region
  $region42: #{bilstm_forward.1} parent=0 // pred_check
    _
  $region43: #{bilstm_forward.1} parent=0 // pred_check_branch
    %1728 = sbr.rel (0) target = $region45
  $region44: #{bilstm_forward.1} parent=0 // pred_region
    _
  $region45: #{bilstm_forward.1} parent=0 // pred_fallthru
    _

</llo_original>
